<compile_context>
chip_gen: v6e
topology: v6e:2x2x1
jax: 0.10.0
libtpu: 0.0.40
codegen_flags: <defaults>
</compile_context>

<pallas_src>
import functools

import jax
import jax.numpy as jnp
from jax.experimental import pallas as pl
from jax.experimental.pallas import tpu as pltpu

D_IN = 28 * 28        # 784
D_PAD = 896           # 7 * 128 -> lane-dense loads/stores
H1 = 128
H2 = 64
H3 = 16


def _round_up(x, m):
    return (x + m - 1) // m * m


def _ae_kernel(x_ref, w1_ref, w2_ref, w34_ref, w5_ref, w6_ref, o_ref):
    cdt = w1_ref.dtype  # MXU feed dtype (bf16 or f32); accumulation is f32.
    # Encoder
    h = jnp.dot(x_ref[...], w1_ref[...], preferred_element_type=jnp.float32)
    h = jax.nn.sigmoid(h)
    h = jnp.dot(h.astype(cdt), w2_ref[...], preferred_element_type=jnp.float32)
    h = jax.nn.sigmoid(h)
    # Fused encoder-last / decoder-first linear pair (w3 @ w4, no activation
    # between them in the original module), then the decoder's first Tanh.
    h = jnp.dot(h.astype(cdt), w34_ref[...], preferred_element_type=jnp.float32)
    h = jnp.tanh(h)
    h = jnp.dot(h.astype(cdt), w5_ref[...], preferred_element_type=jnp.float32)
    h = jnp.tanh(h)
    h = jnp.dot(h.astype(cdt), w6_ref[...], preferred_element_type=jnp.float32)
    o_ref[...] = jnp.tanh(h).astype(o_ref.dtype)


@functools.partial(jax.jit, static_argnames=("tile_b", "compute_dtype"))
def autoencoder_forward(x, weights, *, tile_b=512, compute_dtype=jnp.bfloat16):
    """x: (B, 784) float32. weights: tuple of 6 (in, out) float32 matrices."""
    B, D = x.shape
    assert D == D_IN
    out_dtype = x.dtype

    w1, w2, w3, w4, w5, w6 = weights

    # Fuse the activation-free 64->16->64 pair into one (64, 64) matrix.
    w34 = jnp.dot(w3, w4)

    # Lane-pad the 784 feature dim to 896: zero rows in w1, zero cols in w6.
    w1p = jnp.zeros((D_PAD, H1), w1.dtype).at[:D_IN, :].set(w1)
    w6p = jnp.zeros((H1, D_PAD), w6.dtype).at[:, :D_IN].set(w6)
    ws = tuple(w.astype(compute_dtype) for w in (w1p, w2, w34, w5, w6p))

    # Batch tile: large (MXU-filling) but clamped + padded for small batches.
    tile = min(tile_b, _round_up(B, 8))
    B_pad = _round_up(B, tile)
    xp = jnp.zeros((B_pad, D_PAD), compute_dtype).at[:B, :D_IN].set(
        x.astype(compute_dtype)
    )

    def w_spec(shape):
        # Whole-array block, same block for every batch tile (VMEM-resident).
        return pl.BlockSpec(shape, lambda i: (0, 0))

    out = pl.pallas_call(
        _ae_kernel,
        out_shape=jax.ShapeDtypeStruct((B_pad, D_PAD), out_dtype),
        grid=(B_pad // tile,),
        in_specs=[pl.BlockSpec((tile, D_PAD), lambda i: (i, 0))]
        + [w_spec(w.shape) for w in ws],
        out_specs=pl.BlockSpec((tile, D_PAD), lambda i: (i, 0)),
        compiler_params=pltpu.CompilerParams(
            # Batch axis is embarrassingly parallel -> megacore / 2-TC sharding.
            dimension_semantics=("parallel",),
            # Headroom for tile_b up to ~1024 with double-buffered in/out tiles.
            vmem_limit_bytes=64 * 1024 * 1024,
        ),
    )(xp, *ws)

    # Slice away batch padding and the 784->896 lane padding.
    return out[:B, :D_IN]


def make_params(key):
    """Deterministic weights matching nn.Linear(in, out, bias=False).

    PyTorch stores weight as (out, in) and computes x @ W.T; we generate
    (out, in) with the same uniform(-1/sqrt(in), 1/sqrt(in)) scheme and return
    the transpose (in, out) so the kernel computes x @ W.
    """
    dims = [(D_IN, H1), (H1, H2), (H2, H3), (H3, H2), (H2, H1), (H1, D_IN)]
    keys = jax.random.split(key, len(dims))
    ws = []
    for k, (fan_in, fan_out) in zip(keys, dims):
        bound = 1.0 / jnp.sqrt(jnp.float32(fan_in))
        w_pt = jax.random.uniform(
            k, (fan_out, fan_in), dtype=jnp.float32, minval=-bound, maxval=bound
        )
        ws.append(w_pt.T)  # (in, out)
    return tuple(ws)


def reference_forward(x, weights):
    w1, w2, w3, w4, w5, w6 = weights
    h = jax.nn.sigmoid(x @ w1)
    h = jax.nn.sigmoid(h @ w2)
    h = h @ w3
    h = jnp.tanh(h @ w4)
    h = jnp.tanh(h @ w5)
    return jnp.tanh(h @ w6)


if __name__ == "__main__":
    key = jax.random.PRNGKey(0)
    k_w, k_x = jax.random.split(key)
    weights = make_params(k_w)

    B = 64
    x = jax.random.normal(k_x, (B, D_IN), dtype=jnp.float32)

    ref = reference_forward(x, weights)

    # Float32 compute path: exact semantics (up to the w3@w4 reassociation).
    out_f32 = autoencoder_forward(x, weights, compute_dtype=jnp.float32)
    out_f32 = jax.block_until_ready(out_f32)
    assert out_f32.shape == (B, D_IN)
    assert jnp.allclose(out_f32, ref, atol=1e-4, rtol=1e-4), "f32 mismatch vs reference"

    # Default bf16-MXU-feed path (f32 accumulation): fast path on v6e/v7x.
    out_bf16 = autoencoder_forward(x, weights)
    out_bf16 = jax.block_until_ready(out_bf16)
    assert out_bf16.shape == (B, D_IN)
    assert jnp.allclose(out_bf16, ref, atol=2e-2, rtol=2e-2), "bf16 mismatch vs reference"

    print("KERNEL_OK")
</pallas_src>

<mosaic_0001>
module attributes {stable_mosaic.version = 11 : i64} {
  func.func @_ae_kernel(%arg0: i32, %arg1: memref<64x896xf32, #tpu.memory_space<vmem>>, %arg2: memref<896x128xf32, #tpu.memory_space<vmem>>, %arg3: memref<128x64xf32, #tpu.memory_space<vmem>>, %arg4: memref<64x64xf32, #tpu.memory_space<vmem>>, %arg5: memref<64x128xf32, #tpu.memory_space<vmem>>, %arg6: memref<128x896xf32, #tpu.memory_space<vmem>>, %arg7: memref<64x896xf32, #tpu.memory_space<vmem>>) attributes {dimension_semantics = [#tpu.dimension_semantics<parallel>], iteration_bounds = array<i64: 1>, scalar_prefetch = 0 : i64, scratch_operands = 0 : i64, tpu.core_type = #tpu.core_type<tc>, window_params = [{transform_indices = @transform_0, window_bounds = array<i64: 64, 896>}, {pipeline_mode = #tpu.pipeline_mode<synchronous>, transform_indices = @transform_1, window_bounds = array<i64: 896, 128>}, {pipeline_mode = #tpu.pipeline_mode<synchronous>, transform_indices = @transform_2, window_bounds = array<i64: 128, 64>}, {pipeline_mode = #tpu.pipeline_mode<synchronous>, transform_indices = @transform_3, window_bounds = array<i64: 64, 64>}, {pipeline_mode = #tpu.pipeline_mode<synchronous>, transform_indices = @transform_4, window_bounds = array<i64: 64, 128>}, {pipeline_mode = #tpu.pipeline_mode<synchronous>, transform_indices = @transform_5, window_bounds = array<i64: 128, 896>}, {transform_indices = @transform_6, window_bounds = array<i64: 64, 896>}]} {
    %c0 = arith.constant 0 : index
    %c0_0 = arith.constant 0 : index
    %0 = vector.load %arg1[%c0, %c0_0] : memref<64x896xf32, #tpu.memory_space<vmem>>, vector<64x896xf32>
    %c0_1 = arith.constant 0 : index
    %c0_2 = arith.constant 0 : index
    %1 = vector.load %arg2[%c0_1, %c0_2] : memref<896x128xf32, #tpu.memory_space<vmem>>, vector<896x128xf32>
    %cst = arith.constant dense<0.000000e+00> : vector<64x128xf32>
    %2 = tpu.matmul %0, %1, %cst {dimension_numbers = #tpu.dot_dimension_numbers<[1], [0], [0], [1], [0, 0, 1, 1], [], []>} : vector<64x896xf32>, vector<896x128xf32>, vector<64x128xf32> -> vector<64x128xf32>
    %3 = arith.negf %2 : vector<64x128xf32>
    %4 = math.exp %3 : vector<64x128xf32>
    %cst_3 = arith.constant 1.000000e+00 : f32
    %5 = vector.broadcast %cst_3 : f32 to vector<64x128xf32>
    %6 = arith.addf %5, %4 : vector<64x128xf32>
    %7 = arith.divf %5, %6 : vector<64x128xf32>
    %c0_4 = arith.constant 0 : index
    %c0_5 = arith.constant 0 : index
    %8 = vector.load %arg3[%c0_4, %c0_5] : memref<128x64xf32, #tpu.memory_space<vmem>>, vector<128x64xf32>
    %cst_6 = arith.constant dense<0.000000e+00> : vector<64x64xf32>
    %9 = tpu.matmul %7, %8, %cst_6 {dimension_numbers = #tpu.dot_dimension_numbers<[1], [0], [0], [1], [0, 0, 1, 1], [], []>} : vector<64x128xf32>, vector<128x64xf32>, vector<64x64xf32> -> vector<64x64xf32>
    %10 = arith.negf %9 : vector<64x64xf32>
    %11 = math.exp %10 : vector<64x64xf32>
    %cst_7 = arith.constant 1.000000e+00 : f32
    %12 = vector.broadcast %cst_7 : f32 to vector<64x64xf32>
    %13 = arith.addf %12, %11 : vector<64x64xf32>
    %14 = arith.divf %12, %13 : vector<64x64xf32>
    %c0_8 = arith.constant 0 : index
    %c0_9 = arith.constant 0 : index
    %15 = vector.load %arg4[%c0_8, %c0_9] : memref<64x64xf32, #tpu.memory_space<vmem>>, vector<64x64xf32>
    %cst_10 = arith.constant dense<0.000000e+00> : vector<64x64xf32>
    %16 = tpu.matmul %14, %15, %cst_10 {dimension_numbers = #tpu.dot_dimension_numbers<[1], [0], [0], [1], [0, 0, 1, 1], [], []>} : vector<64x64xf32>, vector<64x64xf32>, vector<64x64xf32> -> vector<64x64xf32>
    %17 = math.tanh %16 : vector<64x64xf32>
    %c0_11 = arith.constant 0 : index
    %c0_12 = arith.constant 0 : index
    %18 = vector.load %arg5[%c0_11, %c0_12] : memref<64x128xf32, #tpu.memory_space<vmem>>, vector<64x128xf32>
    %cst_13 = arith.constant dense<0.000000e+00> : vector<64x128xf32>
    %19 = tpu.matmul %17, %18, %cst_13 {dimension_numbers = #tpu.dot_dimension_numbers<[1], [0], [0], [1], [0, 0, 1, 1], [], []>} : vector<64x64xf32>, vector<64x128xf32>, vector<64x128xf32> -> vector<64x128xf32>
    %20 = math.tanh %19 : vector<64x128xf32>
    %c0_14 = arith.constant 0 : index
    %c0_15 = arith.constant 0 : index
    %21 = vector.load %arg6[%c0_14, %c0_15] : memref<128x896xf32, #tpu.memory_space<vmem>>, vector<128x896xf32>
    %cst_16 = arith.constant dense<0.000000e+00> : vector<64x896xf32>
    %22 = tpu.matmul %20, %21, %cst_16 {dimension_numbers = #tpu.dot_dimension_numbers<[1], [0], [0], [1], [0, 0, 1, 1], [], []>} : vector<64x128xf32>, vector<128x896xf32>, vector<64x896xf32> -> vector<64x896xf32>
    %23 = math.tanh %22 : vector<64x896xf32>
    %c0_17 = arith.constant 0 : index
    %c0_18 = arith.constant 0 : index
    %24 = vector.load %arg7[%c0_17, %c0_18] : memref<64x896xf32, #tpu.memory_space<vmem>>, vector<64x896xf32>
    tpu.vector_store %arg7[%c0_17, %c0_18], %23 {strides = array<i32>} : memref<64x896xf32, #tpu.memory_space<vmem>>, vector<64x896xf32>,
    return
  }
  func.func @transform_0(%arg0: i32) -> (i32, i32) {
    %c0_i32 = arith.constant 0 : i32
    %c0_i32_0 = arith.constant 0 : i32
    return %arg0, %c0_i32 : i32, i32
  }
  func.func @transform_1(%arg0: i32) -> (i32, i32) {
    %c0_i32 = arith.constant 0 : i32
    %c0_i32_0 = arith.constant 0 : i32
    %c0_i32_1 = arith.constant 0 : i32
    return %c0_i32, %c0_i32_0 : i32, i32
  }
  func.func @transform_2(%arg0: i32) -> (i32, i32) {
    %c0_i32 = arith.constant 0 : i32
    %c0_i32_0 = arith.constant 0 : i32
    %c0_i32_1 = arith.constant 0 : i32
    return %c0_i32, %c0_i32_0 : i32, i32
  }
  func.func @transform_3(%arg0: i32) -> (i32, i32) {
    %c0_i32 = arith.constant 0 : i32
    %c0_i32_0 = arith.constant 0 : i32
    %c0_i32_1 = arith.constant 0 : i32
    return %c0_i32, %c0_i32_0 : i32, i32
  }
  func.func @transform_4(%arg0: i32) -> (i32, i32) {
    %c0_i32 = arith.constant 0 : i32
    %c0_i32_0 = arith.constant 0 : i32
    %c0_i32_1 = arith.constant 0 : i32
    return %c0_i32, %c0_i32_0 : i32, i32
  }
  func.func @transform_5(%arg0: i32) -> (i32, i32) {
    %c0_i32 = arith.constant 0 : i32
    %c0_i32_0 = arith.constant 0 : i32
    %c0_i32_1 = arith.constant 0 : i32
    return %c0_i32, %c0_i32_0 : i32, i32
  }
  func.func @transform_6(%arg0: i32) -> (i32, i32) {
    %c0_i32 = arith.constant 0 : i32
    %c0_i32_0 = arith.constant 0 : i32
    return %arg0, %c0_i32 : i32, i32
  }
}

</mosaic_0001>

<llo_original>
// kernel: autoencoder_forward.1
$region0: #{autoencoder_forward.1}
  #allocation0 [shape = 'u32[]', space=smem, size = 0x4, offset = 0x4, fixed_abs, tag = 'smem constant byte address 0x4 - core index']
  #allocation1 [shape = 'u32[144,128]{1,0:T(1,128)}', space=vmem, size = 0x12000, scoped, tag = 'internal scratch']
  %s0 = inlined_call_operand.vmem [shape: f32[64,896], index: 0, kind: input, shape index: {}]
  %s1 = inlined_call_operand.vmem [shape: f32[896,128], index: 1, kind: input, shape index: {}]
  %s2 = inlined_call_operand.vmem [shape: f32[128,64], index: 2, kind: input, shape index: {}]
  %s3 = inlined_call_operand.vmem [shape: f32[64,64], index: 3, kind: input, shape index: {}]
  %s4 = inlined_call_operand.vmem [shape: f32[64,128], index: 4, kind: input, shape index: {}]
  %s5 = inlined_call_operand.vmem [shape: f32[128,896], index: 5, kind: input, shape index: {}]
  %s6 = inlined_call_operand.hbm [shape: f32[64,896], index: 6, kind: output, shape index: {}]
  %s7 = sld [smem:[#allocation0]]
  $region34: #{autoencoder_forward.1} parent=0
    _
  %s9 = ssub.s32 1, %s7
  %s10 = scalar_select 0, %s9, %s7
  $region1: #{autoencoder_forward.1} parent=0
    #allocation2 [shape = 'u8[229376]{0}', space=vmem, size = 0x38000, scoped, tag = 'output window, operand 0, single buffered']
    #allocation3 [shape = 's32[1]{0}', space=sflag, size = 0x4, scoped, tag = 'scoped memory for autoencoder_forward.1']
    %11 = vsyncpa [#allocation3], 0
    // Predicated region
    $region2: #{autoencoder_forward.1} parent=1 // pred_check
      _
    $region3: #{autoencoder_forward.1} parent=1 // pred_check_branch
      %13 = sbr.rel (0) target = $region5
    $region4: #{autoencoder_forward.1} parent=1 // pred_region
      _
    $region5: #{autoencoder_forward.1} parent=1 // pred_fallthru
      _
    // Predicated region
    $region6: #{autoencoder_forward.1} parent=1 // pred_check
      _
    $region7: #{autoencoder_forward.1} parent=1 // pred_check_branch
      %15 = sbr.rel (0) target = $region9
    $region8: #{autoencoder_forward.1} parent=1 // pred_region
      _
    $region9: #{autoencoder_forward.1} parent=1 // pred_fallthru
      _
    // Predicated region
    $region10: #{autoencoder_forward.1} parent=1 // pred_check
      _
    $region11: #{autoencoder_forward.1} parent=1 // pred_check_branch
      %17 = sbr.rel (0) target = $region13
    $region12: #{autoencoder_forward.1} parent=1 // pred_region
      _
    $region13: #{autoencoder_forward.1} parent=1 // pred_fallthru
      _
    // Predicated region
    $region14: #{autoencoder_forward.1} parent=1 // pred_check
      _
    $region15: #{autoencoder_forward.1} parent=1 // pred_check_branch
      %19 = sbr.rel (0) target = $region17
    $region16: #{autoencoder_forward.1} parent=1 // pred_region
      _
    $region17: #{autoencoder_forward.1} parent=1 // pred_fallthru
      _
    // Predicated region
    $region18: #{autoencoder_forward.1} parent=1 // pred_check
      _
    $region19: #{autoencoder_forward.1} parent=1 // pred_check_branch
      %21 = sbr.rel (0) target = $region21
    $region20: #{autoencoder_forward.1} parent=1 // pred_region
      _
    $region21: #{autoencoder_forward.1} parent=1 // pred_fallthru
      _
    // Predicated region
    $region22: #{autoencoder_forward.1} parent=1 // pred_check
      _
    $region23: #{autoencoder_forward.1} parent=1 // pred_check_branch
      %23 = sbr.rel (0) target = $region25
    $region24: #{autoencoder_forward.1} parent=1 // pred_region
      _
    $region25: #{autoencoder_forward.1} parent=1 // pred_fallthru
      _
    %v24 = vld [vmem:[%s0] sm:$0xff]
    %v25 = vld [vmem:[%s0 + $0x8] sm:$0xff]
    %v26 = vld [vmem:[%s0 + $0x10] sm:$0xff]
    %v27 = vld [vmem:[%s0 + $0x18] sm:$0xff]
    %v28 = vld [vmem:[%s0 + $0x20] sm:$0xff]
    %v29 = vld [vmem:[%s0 + $0x28] sm:$0xff]
    %v30 = vld [vmem:[%s0 + $0x30] sm:$0xff]
    %v31 = vld [vmem:[%s0 + $0x38] sm:$0xff]
    %v32 = vld [vmem:[%s0 + $0x40] sm:$0xff]
    %v33 = vld [vmem:[%s0 + $0x48] sm:$0xff]
    %v34 = vld [vmem:[%s0 + $0x50] sm:$0xff]
    %v35 = vld [vmem:[%s0 + $0x58] sm:$0xff]
    %v36 = vld [vmem:[%s0 + $0x60] sm:$0xff]
    %v37 = vld [vmem:[%s0 + $0x68] sm:$0xff]
    %v38 = vld [vmem:[%s0 + $0x70] sm:$0xff]
    %v39 = vld [vmem:[%s0 + $0x78] sm:$0xff]
    %v40 = vld [vmem:[%s0 + $0x80] sm:$0xff]
    %v41 = vld [vmem:[%s0 + $0x88] sm:$0xff]
    %v42 = vld [vmem:[%s0 + $0x90] sm:$0xff]
    %v43 = vld [vmem:[%s0 + $0x98] sm:$0xff]
    %v44 = vld [vmem:[%s0 + $0xa0] sm:$0xff]
    %v45 = vld [vmem:[%s0 + $0xa8] sm:$0xff]
    %v46 = vld [vmem:[%s0 + $0xb0] sm:$0xff]
    %v47 = vld [vmem:[%s0 + $0xb8] sm:$0xff]
    %v48 = vld [vmem:[%s0 + $0xc0] sm:$0xff]
    %v49 = vld [vmem:[%s0 + $0xc8] sm:$0xff]
    %v50 = vld [vmem:[%s0 + $0xd0] sm:$0xff]
    %v51 = vld [vmem:[%s0 + $0xd8] sm:$0xff]
    %v52 = vld [vmem:[%s0 + $0xe0] sm:$0xff]
    %v53 = vld [vmem:[%s0 + $0xe8] sm:$0xff]
    %v54 = vld [vmem:[%s0 + $0xf0] sm:$0xff]
    %v55 = vld [vmem:[%s0 + $0xf8] sm:$0xff]
    %v56 = vld [vmem:[%s0 + $0x100] sm:$0xff]
    %v57 = vld [vmem:[%s0 + $0x108] sm:$0xff]
    %v58 = vld [vmem:[%s0 + $0x110] sm:$0xff]
    %v59 = vld [vmem:[%s0 + $0x118] sm:$0xff]
    %v60 = vld [vmem:[%s0 + $0x120] sm:$0xff]
    %v61 = vld [vmem:[%s0 + $0x128] sm:$0xff]
    %v62 = vld [vmem:[%s0 + $0x130] sm:$0xff]
    %v63 = vld [vmem:[%s0 + $0x138] sm:$0xff]
    %v64 = vld [vmem:[%s0 + $0x140] sm:$0xff]
    %v65 = vld [vmem:[%s0 + $0x148] sm:$0xff]
    %v66 = vld [vmem:[%s0 + $0x150] sm:$0xff]
    %v67 = vld [vmem:[%s0 + $0x158] sm:$0xff]
    %v68 = vld [vmem:[%s0 + $0x160] sm:$0xff]
    %v69 = vld [vmem:[%s0 + $0x168] sm:$0xff]
    %v70 = vld [vmem:[%s0 + $0x170] sm:$0xff]
    %v71 = vld [vmem:[%s0 + $0x178] sm:$0xff]
    %v72 = vld [vmem:[%s0 + $0x180] sm:$0xff]
    %v73 = vld [vmem:[%s0 + $0x188] sm:$0xff]
    %v74 = vld [vmem:[%s0 + $0x190] sm:$0xff]
    %v75 = vld [vmem:[%s0 + $0x198] sm:$0xff]
    %v76 = vld [vmem:[%s0 + $0x1a0] sm:$0xff]
    %v77 = vld [vmem:[%s0 + $0x1a8] sm:$0xff]
    %v78 = vld [vmem:[%s0 + $0x1b0] sm:$0xff]
    %v79 = vld [vmem:[%s0 + $0x1b8] sm:$0xff]
    %v80 = vld [vmem:[%s1] sm:$0xff]
    %v81 = vld [vmem:[%s1 + $0x8] sm:$0xff]
    %v82 = vld [vmem:[%s1 + $0x10] sm:$0xff]
    %v83 = vld [vmem:[%s1 + $0x18] sm:$0xff]
    %v84 = vld [vmem:[%s1 + $0x20] sm:$0xff]
    %v85 = vld [vmem:[%s1 + $0x28] sm:$0xff]
    %v86 = vld [vmem:[%s1 + $0x30] sm:$0xff]
    %v87 = vld [vmem:[%s1 + $0x38] sm:$0xff]
    %v88 = vld [vmem:[%s1 + $0x40] sm:$0xff]
    %v89 = vld [vmem:[%s1 + $0x48] sm:$0xff]
    %v90 = vld [vmem:[%s1 + $0x50] sm:$0xff]
    %v91 = vld [vmem:[%s1 + $0x58] sm:$0xff]
    %v92 = vld [vmem:[%s1 + $0x60] sm:$0xff]
    %v93 = vld [vmem:[%s1 + $0x68] sm:$0xff]
    %v94 = vld [vmem:[%s1 + $0x70] sm:$0xff]
    %v95 = vld [vmem:[%s1 + $0x78] sm:$0xff]
    %v96 = vld [vmem:[%s1 + $0x80] sm:$0xff]
    %v97 = vld [vmem:[%s1 + $0x88] sm:$0xff]
    %v98 = vld [vmem:[%s1 + $0x90] sm:$0xff]
    %v99 = vld [vmem:[%s1 + $0x98] sm:$0xff]
    %v100 = vld [vmem:[%s1 + $0xa0] sm:$0xff]
    %v101 = vld [vmem:[%s1 + $0xa8] sm:$0xff]
    %v102 = vld [vmem:[%s1 + $0xb0] sm:$0xff]
    %v103 = vld [vmem:[%s1 + $0xb8] sm:$0xff]
    %v104 = vld [vmem:[%s1 + $0xc0] sm:$0xff]
    %v105 = vld [vmem:[%s1 + $0xc8] sm:$0xff]
    %v106 = vld [vmem:[%s1 + $0xd0] sm:$0xff]
    %v107 = vld [vmem:[%s1 + $0xd8] sm:$0xff]
    %v108 = vld [vmem:[%s1 + $0xe0] sm:$0xff]
    %v109 = vld [vmem:[%s1 + $0xe8] sm:$0xff]
    %v110 = vld [vmem:[%s1 + $0xf0] sm:$0xff]
    %v111 = vld [vmem:[%s1 + $0xf8] sm:$0xff]
    %v112 = vld [vmem:[%s1 + $0x100] sm:$0xff]
    %v113 = vld [vmem:[%s1 + $0x108] sm:$0xff]
    %v114 = vld [vmem:[%s1 + $0x110] sm:$0xff]
    %v115 = vld [vmem:[%s1 + $0x118] sm:$0xff]
    %v116 = vld [vmem:[%s1 + $0x120] sm:$0xff]
    %v117 = vld [vmem:[%s1 + $0x128] sm:$0xff]
    %v118 = vld [vmem:[%s1 + $0x130] sm:$0xff]
    %v119 = vld [vmem:[%s1 + $0x138] sm:$0xff]
    %v120 = vld [vmem:[%s1 + $0x140] sm:$0xff]
    %v121 = vld [vmem:[%s1 + $0x148] sm:$0xff]
    %v122 = vld [vmem:[%s1 + $0x150] sm:$0xff]
    %v123 = vld [vmem:[%s1 + $0x158] sm:$0xff]
    %v124 = vld [vmem:[%s1 + $0x160] sm:$0xff]
    %v125 = vld [vmem:[%s1 + $0x168] sm:$0xff]
    %v126 = vld [vmem:[%s1 + $0x170] sm:$0xff]
    %v127 = vld [vmem:[%s1 + $0x178] sm:$0xff]
    %v128 = vld [vmem:[%s1 + $0x180] sm:$0xff]
    %v129 = vld [vmem:[%s1 + $0x188] sm:$0xff]
    %v130 = vld [vmem:[%s1 + $0x190] sm:$0xff]
    %v131 = vld [vmem:[%s1 + $0x198] sm:$0xff]
    %v132 = vld [vmem:[%s1 + $0x1a0] sm:$0xff]
    %v133 = vld [vmem:[%s1 + $0x1a8] sm:$0xff]
    %v134 = vld [vmem:[%s1 + $0x1b0] sm:$0xff]
    %v135 = vld [vmem:[%s1 + $0x1b8] sm:$0xff]
    %v136 = vld [vmem:[%s1 + $0x1c0] sm:$0xff]
    %v137 = vld [vmem:[%s1 + $0x1c8] sm:$0xff]
    %v138 = vld [vmem:[%s1 + $0x1d0] sm:$0xff]
    %v139 = vld [vmem:[%s1 + $0x1d8] sm:$0xff]
    %v140 = vld [vmem:[%s1 + $0x1e0] sm:$0xff]
    %v141 = vld [vmem:[%s1 + $0x1e8] sm:$0xff]
    %v142 = vld [vmem:[%s1 + $0x1f0] sm:$0xff]
    %v143 = vld [vmem:[%s1 + $0x1f8] sm:$0xff]
    %v144 = vld [vmem:[%s1 + $0x200] sm:$0xff]
    %v145 = vld [vmem:[%s1 + $0x208] sm:$0xff]
    %v146 = vld [vmem:[%s1 + $0x210] sm:$0xff]
    %v147 = vld [vmem:[%s1 + $0x218] sm:$0xff]
    %v148 = vld [vmem:[%s1 + $0x220] sm:$0xff]
    %v149 = vld [vmem:[%s1 + $0x228] sm:$0xff]
    %v150 = vld [vmem:[%s1 + $0x230] sm:$0xff]
    %v151 = vld [vmem:[%s1 + $0x238] sm:$0xff]
    %v152 = vld [vmem:[%s1 + $0x240] sm:$0xff]
    %v153 = vld [vmem:[%s1 + $0x248] sm:$0xff]
    %v154 = vld [vmem:[%s1 + $0x250] sm:$0xff]
    %v155 = vld [vmem:[%s1 + $0x258] sm:$0xff]
    %v156 = vld [vmem:[%s1 + $0x260] sm:$0xff]
    %v157 = vld [vmem:[%s1 + $0x268] sm:$0xff]
    %v158 = vld [vmem:[%s1 + $0x270] sm:$0xff]
    %v159 = vld [vmem:[%s1 + $0x278] sm:$0xff]
    %v160 = vld [vmem:[%s1 + $0x280] sm:$0xff]
    %v161 = vld [vmem:[%s1 + $0x288] sm:$0xff]
    %v162 = vld [vmem:[%s1 + $0x290] sm:$0xff]
    %v163 = vld [vmem:[%s1 + $0x298] sm:$0xff]
    %v164 = vld [vmem:[%s1 + $0x2a0] sm:$0xff]
    %v165 = vld [vmem:[%s1 + $0x2a8] sm:$0xff]
    %v166 = vld [vmem:[%s1 + $0x2b0] sm:$0xff]
    %v167 = vld [vmem:[%s1 + $0x2b8] sm:$0xff]
    %v168 = vld [vmem:[%s1 + $0x2c0] sm:$0xff]
    %v169 = vld [vmem:[%s1 + $0x2c8] sm:$0xff]
    %v170 = vld [vmem:[%s1 + $0x2d0] sm:$0xff]
    %v171 = vld [vmem:[%s1 + $0x2d8] sm:$0xff]
    %v172 = vld [vmem:[%s1 + $0x2e0] sm:$0xff]
    %v173 = vld [vmem:[%s1 + $0x2e8] sm:$0xff]
    %v174 = vld [vmem:[%s1 + $0x2f0] sm:$0xff]
    %v175 = vld [vmem:[%s1 + $0x2f8] sm:$0xff]
    %v176 = vld [vmem:[%s1 + $0x300] sm:$0xff]
    %v177 = vld [vmem:[%s1 + $0x308] sm:$0xff]
    %v178 = vld [vmem:[%s1 + $0x310] sm:$0xff]
    %v179 = vld [vmem:[%s1 + $0x318] sm:$0xff]
    %v180 = vld [vmem:[%s1 + $0x320] sm:$0xff]
    %v181 = vld [vmem:[%s1 + $0x328] sm:$0xff]
    %v182 = vld [vmem:[%s1 + $0x330] sm:$0xff]
    %v183 = vld [vmem:[%s1 + $0x338] sm:$0xff]
    %v184 = vld [vmem:[%s1 + $0x340] sm:$0xff]
    %v185 = vld [vmem:[%s1 + $0x348] sm:$0xff]
    %v186 = vld [vmem:[%s1 + $0x350] sm:$0xff]
    %v187 = vld [vmem:[%s1 + $0x358] sm:$0xff]
    %v188 = vld [vmem:[%s1 + $0x360] sm:$0xff]
    %v189 = vld [vmem:[%s1 + $0x368] sm:$0xff]
    %v190 = vld [vmem:[%s1 + $0x370] sm:$0xff]
    %v191 = vld [vmem:[%s1 + $0x378] sm:$0xff]
    %192 = vmatprep.subr.mxu0 0.0
    %193 = vmatpush1.msra.mxu0 %v95
    %194 = vmatprep.subr.mxu0 0.0
    %195 = vmatpush1.msra.mxu0 %v94
    %196 = vmatprep.subr.mxu0 0.0
    %197 = vmatpush1.msra.mxu0 %v93
    %198 = vmatprep.subr.mxu0 0.0
    %199 = vmatpush1.msra.mxu0 %v92
    %200 = vmatprep.subr.mxu0 0.0
    %201 = vmatpush1.msra.mxu0 %v91
    %202 = vmatprep.subr.mxu0 0.0
    %203 = vmatpush1.msra.mxu0 %v90
    %204 = vmatprep.subr.mxu0 0.0
    %205 = vmatpush1.msra.mxu0 %v89
    %206 = vmatprep.subr.mxu0 0.0
    %207 = vmatpush1.msra.mxu0 %v88
    %208 = vmatprep.subr.mxu0 0.0
    %209 = vmatpush1.msra.mxu0 %v87
    %210 = vmatprep.subr.mxu0 0.0
    %211 = vmatpush1.msra.mxu0 %v86
    %212 = vmatprep.subr.mxu0 0.0
    %213 = vmatpush1.msra.mxu0 %v85
    %214 = vmatprep.subr.mxu0 0.0
    %215 = vmatpush1.msra.mxu0 %v84
    %216 = vmatprep.subr.mxu0 0.0
    %217 = vmatpush1.msra.mxu0 %v83
    %218 = vmatprep.subr.mxu0 0.0
    %219 = vmatpush1.msra.mxu0 %v82
    %220 = vmatprep.subr.mxu0 0.0
    %221 = vmatpush1.msra.mxu0 %v81
    %222 = vmatprep.subr.mxu0 0.0
    %223 = vmatpush1.msra.mxu0 %v80
    %224 = vmatprep.subr.mxu0 0.0
    %225 = vmatpush2.msra.mxu0 %v111
    %226 = vmatprep.subr.mxu0 0.0
    %227 = vmatpush2.msra.mxu0 %v110
    %228 = vmatprep.subr.mxu0 0.0
    %229 = vmatpush2.msra.mxu0 %v109
    %230 = vmatprep.subr.mxu0 0.0
    %231 = vmatpush2.msra.mxu0 %v108
    %232 = vmatprep.subr.mxu0 0.0
    %233 = vmatpush2.msra.mxu0 %v107
    %234 = vmatprep.subr.mxu0 0.0
    %235 = vmatpush2.msra.mxu0 %v106
    %236 = vmatprep.subr.mxu0 0.0
    %237 = vmatpush2.msra.mxu0 %v105
    %238 = vmatprep.subr.mxu0 0.0
    %239 = vmatpush2.msra.mxu0 %v104
    %240 = vmatprep.subr.mxu0 0.0
    %241 = vmatpush2.msra.mxu0 %v103
    %242 = vmatprep.subr.mxu0 0.0
    %243 = vmatpush2.msra.mxu0 %v102
    %244 = vmatprep.subr.mxu0 0.0
    %245 = vmatpush2.msra.mxu0 %v101
    %246 = vmatprep.subr.mxu0 0.0
    %247 = vmatpush2.msra.mxu0 %v100
    %248 = vmatprep.subr.mxu0 0.0
    %249 = vmatpush2.msra.mxu0 %v99
    %250 = vmatprep.subr.mxu0 0.0
    %251 = vmatpush2.msra.mxu0 %v98
    %252 = vmatprep.subr.mxu0 0.0
    %253 = vmatpush2.msra.mxu0 %v97
    %254 = vmatprep.subr.mxu0 0.0
    %255 = vmatpush2.msra.mxu0 %v96
    %256 = vmatprep.mubr.f32.mxu0 %v25
    %257 = vmatmul.mubr.f32.gmra.mxu0 %v24
    %v258 = vpop.f32.mrf.mxu0
    %v259 = vadd.f32 0.0, %v258
    %v260 = vpop.f32.mrf.mxu0
    %261 = vmatprep.mubr.f32.mxu0 %v32
    %262 = vmatmul.mubr.f32.gmra.mxu0 %v31
    %v263 = vpop.f32.mrf.mxu0
    %v264 = vadd.f32 0.0, %v263
    %v265 = vpop.f32.mrf.mxu0
    %266 = vmatprep.mubr.f32.mxu0 %v39
    %267 = vmatmul.mubr.f32.gmra.mxu0 %v38
    %v268 = vpop.f32.mrf.mxu0
    %v269 = vadd.f32 0.0, %v268
    %v270 = vpop.f32.mrf.mxu0
    %271 = vmatprep.mubr.f32.mxu0 %v46
    %272 = vmatmul.mubr.f32.gmra.mxu0 %v45
    %v273 = vpop.f32.mrf.mxu0
    %v274 = vadd.f32 0.0, %v273
    %v275 = vpop.f32.mrf.mxu0
    %276 = vmatprep.mubr.f32.mxu0 %v53
    %277 = vmatmul.mubr.f32.gmra.mxu0 %v52
    %v278 = vpop.f32.mrf.mxu0
    %v279 = vadd.f32 0.0, %v278
    %v280 = vpop.f32.mrf.mxu0
    %281 = vmatprep.mubr.f32.mxu0 %v60
    %282 = vmatmul.mubr.f32.gmra.mxu0 %v59
    %v283 = vpop.f32.mrf.mxu0
    %v284 = vadd.f32 0.0, %v283
    %v285 = vpop.f32.mrf.mxu0
    %286 = vmatprep.mubr.f32.mxu0 %v67
    %287 = vmatmul.mubr.f32.gmra.mxu0 %v66
    %v288 = vpop.f32.mrf.mxu0
    %v289 = vadd.f32 0.0, %v288
    %v290 = vpop.f32.mrf.mxu0
    %291 = vmatprep.mubr.f32.mxu0 %v74
    %292 = vmatmul.mubr.f32.gmra.mxu0 %v73
    %v293 = vpop.f32.mrf.mxu0
    %v294 = vadd.f32 0.0, %v293
    %v295 = vpop.f32.mrf.mxu0
    %296 = vdwg.mxu0
    %297 = vmatprep.subr.mxu0 0.0
    %298 = vmatpush1.msra.mxu0 %v127
    %299 = vmatprep.subr.mxu0 0.0
    %300 = vmatpush1.msra.mxu0 %v126
    %301 = vmatprep.subr.mxu0 0.0
    %302 = vmatpush1.msra.mxu0 %v125
    %303 = vmatprep.subr.mxu0 0.0
    %304 = vmatpush1.msra.mxu0 %v124
    %305 = vmatprep.subr.mxu0 0.0
    %306 = vmatpush1.msra.mxu0 %v123
    %307 = vmatprep.subr.mxu0 0.0
    %308 = vmatpush1.msra.mxu0 %v122
    %309 = vmatprep.subr.mxu0 0.0
    %310 = vmatpush1.msra.mxu0 %v121
    %311 = vmatprep.subr.mxu0 0.0
    %312 = vmatpush1.msra.mxu0 %v120
    %313 = vmatprep.subr.mxu0 0.0
    %314 = vmatpush1.msra.mxu0 %v119
    %315 = vmatprep.subr.mxu0 0.0
    %316 = vmatpush1.msra.mxu0 %v118
    %317 = vmatprep.subr.mxu0 0.0
    %318 = vmatpush1.msra.mxu0 %v117
    %319 = vmatprep.subr.mxu0 0.0
    %320 = vmatpush1.msra.mxu0 %v116
    %321 = vmatprep.subr.mxu0 0.0
    %322 = vmatpush1.msra.mxu0 %v115
    %323 = vmatprep.subr.mxu0 0.0
    %324 = vmatpush1.msra.mxu0 %v114
    %325 = vmatprep.subr.mxu0 0.0
    %326 = vmatpush1.msra.mxu0 %v113
    %327 = vmatprep.subr.mxu0 0.0
    %328 = vmatpush1.msra.mxu0 %v112
    %329 = vmatprep.subr.mxu0 0.0
    %330 = vmatpush2.msra.mxu0 %v143
    %331 = vmatprep.subr.mxu0 0.0
    %332 = vmatpush2.msra.mxu0 %v142
    %333 = vmatprep.subr.mxu0 0.0
    %334 = vmatpush2.msra.mxu0 %v141
    %335 = vmatprep.subr.mxu0 0.0
    %336 = vmatpush2.msra.mxu0 %v140
    %337 = vmatprep.subr.mxu0 0.0
    %338 = vmatpush2.msra.mxu0 %v139
    %339 = vmatprep.subr.mxu0 0.0
    %340 = vmatpush2.msra.mxu0 %v138
    %341 = vmatprep.subr.mxu0 0.0
    %342 = vmatpush2.msra.mxu0 %v137
    %343 = vmatprep.subr.mxu0 0.0
    %344 = vmatpush2.msra.mxu0 %v136
    %345 = vmatprep.subr.mxu0 0.0
    %346 = vmatpush2.msra.mxu0 %v135
    %347 = vmatprep.subr.mxu0 0.0
    %348 = vmatpush2.msra.mxu0 %v134
    %349 = vmatprep.subr.mxu0 0.0
    %350 = vmatpush2.msra.mxu0 %v133
    %351 = vmatprep.subr.mxu0 0.0
    %352 = vmatpush2.msra.mxu0 %v132
    %353 = vmatprep.subr.mxu0 0.0
    %354 = vmatpush2.msra.mxu0 %v131
    %355 = vmatprep.subr.mxu0 0.0
    %356 = vmatpush2.msra.mxu0 %v130
    %357 = vmatprep.subr.mxu0 0.0
    %358 = vmatpush2.msra.mxu0 %v129
    %359 = vmatprep.subr.mxu0 0.0
    %360 = vmatpush2.msra.mxu0 %v128
    %361 = vmatprep.mubr.f32.mxu0 %v27
    %362 = vmatmul.mubr.f32.gmra.mxu0 %v26
    %v363 = vpop.f32.mrf.mxu0
    %v364 = vadd.f32 %v259, %v363
    %v365 = vpop.f32.mrf.mxu0
    %366 = vmatprep.mubr.f32.mxu0 %v34
    %367 = vmatmul.mubr.f32.gmra.mxu0 %v33
    %v368 = vpop.f32.mrf.mxu0
    %v369 = vadd.f32 %v264, %v368
    %v370 = vpop.f32.mrf.mxu0
    %371 = vmatprep.mubr.f32.mxu0 %v41
    %372 = vmatmul.mubr.f32.gmra.mxu0 %v40
    %v373 = vpop.f32.mrf.mxu0
    %v374 = vadd.f32 %v269, %v373
    %v375 = vpop.f32.mrf.mxu0
    %376 = vmatprep.mubr.f32.mxu0 %v48
    %377 = vmatmul.mubr.f32.gmra.mxu0 %v47
    %v378 = vpop.f32.mrf.mxu0
    %v379 = vadd.f32 %v274, %v378
    %v380 = vpop.f32.mrf.mxu0
    %381 = vmatprep.mubr.f32.mxu0 %v55
    %382 = vmatmul.mubr.f32.gmra.mxu0 %v54
    %v383 = vpop.f32.mrf.mxu0
    %v384 = vadd.f32 %v279, %v383
    %v385 = vpop.f32.mrf.mxu0
    %386 = vmatprep.mubr.f32.mxu0 %v62
    %387 = vmatmul.mubr.f32.gmra.mxu0 %v61
    %v388 = vpop.f32.mrf.mxu0
    %v389 = vadd.f32 %v284, %v388
    %v390 = vpop.f32.mrf.mxu0
    %391 = vmatprep.mubr.f32.mxu0 %v69
    %392 = vmatmul.mubr.f32.gmra.mxu0 %v68
    %v393 = vpop.f32.mrf.mxu0
    %v394 = vadd.f32 %v289, %v393
    %v395 = vpop.f32.mrf.mxu0
    %396 = vmatprep.mubr.f32.mxu0 %v76
    %397 = vmatmul.mubr.f32.gmra.mxu0 %v75
    %v398 = vpop.f32.mrf.mxu0
    %v399 = vadd.f32 %v294, %v398
    %v400 = vpop.f32.mrf.mxu0
    %401 = vdwg.mxu0
    %402 = vmatprep.subr.mxu0 0.0
    %403 = vmatpush1.msra.mxu0 %v159
    %404 = vmatprep.subr.mxu0 0.0
    %405 = vmatpush1.msra.mxu0 %v158
    %406 = vmatprep.subr.mxu0 0.0
    %407 = vmatpush1.msra.mxu0 %v157
    %408 = vmatprep.subr.mxu0 0.0
    %409 = vmatpush1.msra.mxu0 %v156
    %410 = vmatprep.subr.mxu0 0.0
    %411 = vmatpush1.msra.mxu0 %v155
    %412 = vmatprep.subr.mxu0 0.0
    %413 = vmatpush1.msra.mxu0 %v154
    %414 = vmatprep.subr.mxu0 0.0
    %415 = vmatpush1.msra.mxu0 %v153
    %416 = vmatprep.subr.mxu0 0.0
    %417 = vmatpush1.msra.mxu0 %v152
    %418 = vmatprep.subr.mxu0 0.0
    %419 = vmatpush1.msra.mxu0 %v151
    %420 = vmatprep.subr.mxu0 0.0
    %421 = vmatpush1.msra.mxu0 %v150
    %422 = vmatprep.subr.mxu0 0.0
    %423 = vmatpush1.msra.mxu0 %v149
    %424 = vmatprep.subr.mxu0 0.0
    %425 = vmatpush1.msra.mxu0 %v148
    %426 = vmatprep.subr.mxu0 0.0
    %427 = vmatpush1.msra.mxu0 %v147
    %428 = vmatprep.subr.mxu0 0.0
    %429 = vmatpush1.msra.mxu0 %v146
    %430 = vmatprep.subr.mxu0 0.0
    %431 = vmatpush1.msra.mxu0 %v145
    %432 = vmatprep.subr.mxu0 0.0
    %433 = vmatpush1.msra.mxu0 %v144
    %434 = vmatprep.subr.mxu0 0.0
    %435 = vmatpush2.msra.mxu0 %v175
    %436 = vmatprep.subr.mxu0 0.0
    %437 = vmatpush2.msra.mxu0 %v174
    %438 = vmatprep.subr.mxu0 0.0
    %439 = vmatpush2.msra.mxu0 %v173
    %440 = vmatprep.subr.mxu0 0.0
    %441 = vmatpush2.msra.mxu0 %v172
    %442 = vmatprep.subr.mxu0 0.0
    %443 = vmatpush2.msra.mxu0 %v171
    %444 = vmatprep.subr.mxu0 0.0
    %445 = vmatpush2.msra.mxu0 %v170
    %446 = vmatprep.subr.mxu0 0.0
    %447 = vmatpush2.msra.mxu0 %v169
    %448 = vmatprep.subr.mxu0 0.0
    %449 = vmatpush2.msra.mxu0 %v168
    %450 = vmatprep.subr.mxu0 0.0
    %451 = vmatpush2.msra.mxu0 %v167
    %452 = vmatprep.subr.mxu0 0.0
    %453 = vmatpush2.msra.mxu0 %v166
    %454 = vmatprep.subr.mxu0 0.0
    %455 = vmatpush2.msra.mxu0 %v165
    %456 = vmatprep.subr.mxu0 0.0
    %457 = vmatpush2.msra.mxu0 %v164
    %458 = vmatprep.subr.mxu0 0.0
    %459 = vmatpush2.msra.mxu0 %v163
    %460 = vmatprep.subr.mxu0 0.0
    %461 = vmatpush2.msra.mxu0 %v162
    %462 = vmatprep.subr.mxu0 0.0
    %463 = vmatpush2.msra.mxu0 %v161
    %464 = vmatprep.subr.mxu0 0.0
    %465 = vmatpush2.msra.mxu0 %v160
    %466 = vmatprep.mubr.f32.mxu0 %v29
    %467 = vmatmul.mubr.f32.gmra.mxu0 %v28
    %v468 = vpop.f32.mrf.mxu0
    %v469 = vadd.f32 %v364, %v468
    %v470 = vpop.f32.mrf.mxu0
    %471 = vmatprep.mubr.f32.mxu0 %v36
    %472 = vmatmul.mubr.f32.gmra.mxu0 %v35
    %v473 = vpop.f32.mrf.mxu0
    %v474 = vadd.f32 %v369, %v473
    %v475 = vpop.f32.mrf.mxu0
    %476 = vmatprep.mubr.f32.mxu0 %v43
    %477 = vmatmul.mubr.f32.gmra.mxu0 %v42
    %v478 = vpop.f32.mrf.mxu0
    %v479 = vadd.f32 %v374, %v478
    %v480 = vpop.f32.mrf.mxu0
    %481 = vmatprep.mubr.f32.mxu0 %v50
    %482 = vmatmul.mubr.f32.gmra.mxu0 %v49
    %v483 = vpop.f32.mrf.mxu0
    %v484 = vadd.f32 %v379, %v483
    %v485 = vpop.f32.mrf.mxu0
    %486 = vmatprep.mubr.f32.mxu0 %v57
    %487 = vmatmul.mubr.f32.gmra.mxu0 %v56
    %v488 = vpop.f32.mrf.mxu0
    %v489 = vadd.f32 %v384, %v488
    %v490 = vpop.f32.mrf.mxu0
    %491 = vmatprep.mubr.f32.mxu0 %v64
    %492 = vmatmul.mubr.f32.gmra.mxu0 %v63
    %v493 = vpop.f32.mrf.mxu0
    %v494 = vadd.f32 %v389, %v493
    %v495 = vpop.f32.mrf.mxu0
    %496 = vmatprep.mubr.f32.mxu0 %v71
    %497 = vmatmul.mubr.f32.gmra.mxu0 %v70
    %v498 = vpop.f32.mrf.mxu0
    %v499 = vadd.f32 %v394, %v498
    %v500 = vpop.f32.mrf.mxu0
    %501 = vmatprep.mubr.f32.mxu0 %v78
    %502 = vmatmul.mubr.f32.gmra.mxu0 %v77
    %v503 = vpop.f32.mrf.mxu0
    %v504 = vadd.f32 %v399, %v503
    %v505 = vpop.f32.mrf.mxu0
    %506 = vdwg.mxu0
    %507 = vmatprep.subr.mxu0 0.0
    %508 = vmatpush1.msra.mxu0 %v191
    %509 = vmatprep.subr.mxu0 0.0
    %510 = vmatpush1.msra.mxu0 %v190
    %511 = vmatprep.subr.mxu0 0.0
    %512 = vmatpush1.msra.mxu0 %v189
    %513 = vmatprep.subr.mxu0 0.0
    %514 = vmatpush1.msra.mxu0 %v188
    %515 = vmatprep.subr.mxu0 0.0
    %516 = vmatpush1.msra.mxu0 %v187
    %517 = vmatprep.subr.mxu0 0.0
    %518 = vmatpush1.msra.mxu0 %v186
    %519 = vmatprep.subr.mxu0 0.0
    %520 = vmatpush1.msra.mxu0 %v185
    %521 = vmatprep.subr.mxu0 0.0
    %522 = vmatpush1.msra.mxu0 %v184
    %523 = vmatprep.subr.mxu0 0.0
    %524 = vmatpush1.msra.mxu0 %v183
    %525 = vmatprep.subr.mxu0 0.0
    %526 = vmatpush1.msra.mxu0 %v182
    %527 = vmatprep.subr.mxu0 0.0
    %528 = vmatpush1.msra.mxu0 %v181
    %529 = vmatprep.subr.mxu0 0.0
    %530 = vmatpush1.msra.mxu0 %v180
    %531 = vmatprep.subr.mxu0 0.0
    %532 = vmatpush1.msra.mxu0 %v179
    %533 = vmatprep.subr.mxu0 0.0
    %534 = vmatpush1.msra.mxu0 %v178
    %535 = vmatprep.subr.mxu0 0.0
    %536 = vmatpush1.msra.mxu0 %v177
    %537 = vmatprep.subr.mxu0 0.0
    %538 = vmatpush1.msra.mxu0 %v176
    %539 = vmatprep.subr.mxu0 0.0
    %540 = vmatpush2.msra.mxu0 0.0
    %541 = vmatprep.subr.mxu0 0.0
    %542 = vmatpush2.msra.mxu0 0.0
    %543 = vmatprep.subr.mxu0 0.0
    %544 = vmatpush2.msra.mxu0 0.0
    %545 = vmatprep.subr.mxu0 0.0
    %546 = vmatpush2.msra.mxu0 0.0
    %547 = vmatprep.subr.mxu0 0.0
    %548 = vmatpush2.msra.mxu0 0.0
    %549 = vmatprep.subr.mxu0 0.0
    %550 = vmatpush2.msra.mxu0 0.0
    %551 = vmatprep.subr.mxu0 0.0
    %552 = vmatpush2.msra.mxu0 0.0
    %553 = vmatprep.subr.mxu0 0.0
    %554 = vmatpush2.msra.mxu0 0.0
    %555 = vmatprep.subr.mxu0 0.0
    %556 = vmatpush2.msra.mxu0 0.0
    %557 = vmatprep.subr.mxu0 0.0
    %558 = vmatpush2.msra.mxu0 0.0
    %559 = vmatprep.subr.mxu0 0.0
    %560 = vmatpush2.msra.mxu0 0.0
    %561 = vmatprep.subr.mxu0 0.0
    %562 = vmatpush2.msra.mxu0 0.0
    %563 = vmatprep.subr.mxu0 0.0
    %564 = vmatpush2.msra.mxu0 0.0
    %565 = vmatprep.subr.mxu0 0.0
    %566 = vmatpush2.msra.mxu0 0.0
    %567 = vmatprep.subr.mxu0 0.0
    %568 = vmatpush2.msra.mxu0 0.0
    %569 = vmatprep.subr.mxu0 0.0
    %570 = vmatpush2.msra.mxu0 0.0
    %571 = vmatprep.mubr.f32.mxu0 0.0
    %572 = vmatmul.mubr.f32.gmra.mxu0 %v30
    %v573 = vpop.f32.mrf.mxu0
    %v574 = vadd.f32 %v469, %v573
    %v575 = vpop.f32.mrf.mxu0
    %576 = vmatprep.mubr.f32.mxu0 0.0
    %577 = vmatmul.mubr.f32.gmra.mxu0 %v37
    %v578 = vpop.f32.mrf.mxu0
    %v579 = vadd.f32 %v474, %v578
    %v580 = vpop.f32.mrf.mxu0
    %581 = vmatprep.mubr.f32.mxu0 0.0
    %582 = vmatmul.mubr.f32.gmra.mxu0 %v44
    %v583 = vpop.f32.mrf.mxu0
    %v584 = vadd.f32 %v479, %v583
    %v585 = vpop.f32.mrf.mxu0
    %586 = vmatprep.mubr.f32.mxu0 0.0
    %587 = vmatmul.mubr.f32.gmra.mxu0 %v51
    %v588 = vpop.f32.mrf.mxu0
    %v589 = vadd.f32 %v484, %v588
    %v590 = vpop.f32.mrf.mxu0
    %591 = vmatprep.mubr.f32.mxu0 0.0
    %592 = vmatmul.mubr.f32.gmra.mxu0 %v58
    %v593 = vpop.f32.mrf.mxu0
    %v594 = vadd.f32 %v489, %v593
    %v595 = vpop.f32.mrf.mxu0
    %596 = vmatprep.mubr.f32.mxu0 0.0
    %597 = vmatmul.mubr.f32.gmra.mxu0 %v65
    %v598 = vpop.f32.mrf.mxu0
    %v599 = vadd.f32 %v494, %v598
    %v600 = vpop.f32.mrf.mxu0
    %601 = vmatprep.mubr.f32.mxu0 0.0
    %602 = vmatmul.mubr.f32.gmra.mxu0 %v72
    %v603 = vpop.f32.mrf.mxu0
    %v604 = vadd.f32 %v499, %v603
    %v605 = vpop.f32.mrf.mxu0
    %606 = vmatprep.mubr.f32.mxu0 0.0
    %607 = vmatmul.mubr.f32.gmra.mxu0 %v79
    %v608 = vpop.f32.mrf.mxu0
    %v609 = vadd.f32 %v504, %v608
    %v610 = vpop.f32.mrf.mxu0
    %611 = vdwg.mxu0
    %v612 = vxor.u32 %v574, 2147483648
    %v613 = vxor.u32 %v579, 2147483648
    %v614 = vxor.u32 %v584, 2147483648
    %v615 = vxor.u32 %v589, 2147483648
    %v616 = vxor.u32 %v594, 2147483648
    %v617 = vxor.u32 %v599, 2147483648
    %v618 = vxor.u32 %v604, 2147483648
    %v619 = vxor.u32 %v609, 2147483648
    %v620 = vmul.f32 %v612, 1.442695
    %v621 = vpow.pop %v620
    %v622 = vmul.f32 %v613, 1.442695
    %v623 = vpow.pop %v622
    %v624 = vmul.f32 %v614, 1.442695
    %v625 = vpow.pop %v624
    %v626 = vmul.f32 %v615, 1.442695
    %v627 = vpow.pop %v626
    %v628 = vmul.f32 %v616, 1.442695
    %v629 = vpow.pop %v628
    %v630 = vmul.f32 %v617, 1.442695
    %v631 = vpow.pop %v630
    %v632 = vmul.f32 %v618, 1.442695
    %v633 = vpow.pop %v632
    %v634 = vmul.f32 %v619, 1.442695
    %v635 = vpow.pop %v634
    %v636 = vadd.f32 %v621, 1.0
    %v637 = vadd.f32 %v623, 1.0
    %v638 = vadd.f32 %v625, 1.0
    %v639 = vadd.f32 %v627, 1.0
    %v640 = vadd.f32 %v629, 1.0
    %v641 = vadd.f32 %v631, 1.0
    %v642 = vadd.f32 %v633, 1.0
    %v643 = vadd.f32 %v635, 1.0
    %v644 = vrcp.pop %v636
    %v645 = vmul.f32 1.0, %v644
    %v646 = vrcp.pop %v637
    %v647 = vmul.f32 1.0, %v646
    %v648 = vrcp.pop %v638
    %v649 = vmul.f32 1.0, %v648
    %v650 = vrcp.pop %v639
    %v651 = vmul.f32 1.0, %v650
    %v652 = vrcp.pop %v640
    %v653 = vmul.f32 1.0, %v652
    %v654 = vrcp.pop %v641
    %v655 = vmul.f32 1.0, %v654
    %v656 = vrcp.pop %v642
    %v657 = vmul.f32 1.0, %v656
    %v658 = vrcp.pop %v643
    %v659 = vmul.f32 1.0, %v658
    %v660 = vld [vmem:[%s2] sm:$0xff]
    %v661 = vld [vmem:[%s2 + $0x8] sm:$0xff]
    %v662 = vld [vmem:[%s2 + $0x10] sm:$0xff]
    %v663 = vld [vmem:[%s2 + $0x18] sm:$0xff]
    %v664 = vld [vmem:[%s2 + $0x20] sm:$0xff]
    %v665 = vld [vmem:[%s2 + $0x28] sm:$0xff]
    %v666 = vld [vmem:[%s2 + $0x30] sm:$0xff]
    %v667 = vld [vmem:[%s2 + $0x38] sm:$0xff]
    %v668 = vld [vmem:[%s2 + $0x40] sm:$0xff]
    %v669 = vld [vmem:[%s2 + $0x48] sm:$0xff]
    %v670 = vld [vmem:[%s2 + $0x50] sm:$0xff]
    %v671 = vld [vmem:[%s2 + $0x58] sm:$0xff]
    %v672 = vld [vmem:[%s2 + $0x60] sm:$0xff]
    %v673 = vld [vmem:[%s2 + $0x68] sm:$0xff]
    %v674 = vld [vmem:[%s2 + $0x70] sm:$0xff]
    %v675 = vld [vmem:[%s2 + $0x78] sm:$0xff]
    %676 = vmatprep.subr.mxu0 0.0
    %677 = vmatpush1.msra.mxu0 %v675
    %678 = vmatprep.subr.mxu0 0.0
    %679 = vmatpush1.msra.mxu0 %v674
    %680 = vmatprep.subr.mxu0 0.0
    %681 = vmatpush1.msra.mxu0 %v673
    %682 = vmatprep.subr.mxu0 0.0
    %683 = vmatpush1.msra.mxu0 %v672
    %684 = vmatprep.subr.mxu0 0.0
    %685 = vmatpush1.msra.mxu0 %v671
    %686 = vmatprep.subr.mxu0 0.0
    %687 = vmatpush1.msra.mxu0 %v670
    %688 = vmatprep.subr.mxu0 0.0
    %689 = vmatpush1.msra.mxu0 %v669
    %690 = vmatprep.subr.mxu0 0.0
    %691 = vmatpush1.msra.mxu0 %v668
    %692 = vmatprep.subr.mxu0 0.0
    %693 = vmatpush1.msra.mxu0 %v667
    %694 = vmatprep.subr.mxu0 0.0
    %695 = vmatpush1.msra.mxu0 %v666
    %696 = vmatprep.subr.mxu0 0.0
    %697 = vmatpush1.msra.mxu0 %v665
    %698 = vmatprep.subr.mxu0 0.0
    %699 = vmatpush1.msra.mxu0 %v664
    %700 = vmatprep.subr.mxu0 0.0
    %701 = vmatpush1.msra.mxu0 %v663
    %702 = vmatprep.subr.mxu0 0.0
    %703 = vmatpush1.msra.mxu0 %v662
    %704 = vmatprep.subr.mxu0 0.0
    %705 = vmatpush1.msra.mxu0 %v661
    %706 = vmatprep.subr.mxu0 0.0
    %707 = vmatpush1.msra.mxu0 %v660
    %708 = vmatprep.subr.mxu0 0.0
    %709 = vmatpush2.msra.mxu0 0.0
    %710 = vmatprep.subr.mxu0 0.0
    %711 = vmatpush2.msra.mxu0 0.0
    %712 = vmatprep.subr.mxu0 0.0
    %713 = vmatpush2.msra.mxu0 0.0
    %714 = vmatprep.subr.mxu0 0.0
    %715 = vmatpush2.msra.mxu0 0.0
    %716 = vmatprep.subr.mxu0 0.0
    %717 = vmatpush2.msra.mxu0 0.0
    %718 = vmatprep.subr.mxu0 0.0
    %719 = vmatpush2.msra.mxu0 0.0
    %720 = vmatprep.subr.mxu0 0.0
    %721 = vmatpush2.msra.mxu0 0.0
    %722 = vmatprep.subr.mxu0 0.0
    %723 = vmatpush2.msra.mxu0 0.0
    %724 = vmatprep.subr.mxu0 0.0
    %725 = vmatpush2.msra.mxu0 0.0
    %726 = vmatprep.subr.mxu0 0.0
    %727 = vmatpush2.msra.mxu0 0.0
    %728 = vmatprep.subr.mxu0 0.0
    %729 = vmatpush2.msra.mxu0 0.0
    %730 = vmatprep.subr.mxu0 0.0
    %731 = vmatpush2.msra.mxu0 0.0
    %732 = vmatprep.subr.mxu0 0.0
    %733 = vmatpush2.msra.mxu0 0.0
    %734 = vmatprep.subr.mxu0 0.0
    %735 = vmatpush2.msra.mxu0 0.0
    %736 = vmatprep.subr.mxu0 0.0
    %737 = vmatpush2.msra.mxu0 0.0
    %738 = vmatprep.subr.mxu0 0.0
    %739 = vmatpush2.msra.mxu0 0.0
    %740 = vmatprep.mubr.f32.mxu0 0.0
    %741 = vmatmul.mubr.f32.gmra.mxu0 %v645
    %v742 = vpop.f32.mrf.mxu0
    %v743 = vadd.f32 0.0, %v742
    %v744 = vpop.f32.mrf.mxu0
    %745 = vmatprep.mubr.f32.mxu0 0.0
    %746 = vmatmul.mubr.f32.gmra.mxu0 %v647
    %v747 = vpop.f32.mrf.mxu0
    %v748 = vadd.f32 0.0, %v747
    %v749 = vpop.f32.mrf.mxu0
    %750 = vmatprep.mubr.f32.mxu0 0.0
    %751 = vmatmul.mubr.f32.gmra.mxu0 %v649
    %v752 = vpop.f32.mrf.mxu0
    %v753 = vadd.f32 0.0, %v752
    %v754 = vpop.f32.mrf.mxu0
    %755 = vmatprep.mubr.f32.mxu0 0.0
    %756 = vmatmul.mubr.f32.gmra.mxu0 %v651
    %v757 = vpop.f32.mrf.mxu0
    %v758 = vadd.f32 0.0, %v757
    %v759 = vpop.f32.mrf.mxu0
    %760 = vmatprep.mubr.f32.mxu0 0.0
    %761 = vmatmul.mubr.f32.gmra.mxu0 %v653
    %v762 = vpop.f32.mrf.mxu0
    %v763 = vadd.f32 0.0, %v762
    %v764 = vpop.f32.mrf.mxu0
    %765 = vmatprep.mubr.f32.mxu0 0.0
    %766 = vmatmul.mubr.f32.gmra.mxu0 %v655
    %v767 = vpop.f32.mrf.mxu0
    %v768 = vadd.f32 0.0, %v767
    %v769 = vpop.f32.mrf.mxu0
    %770 = vmatprep.mubr.f32.mxu0 0.0
    %771 = vmatmul.mubr.f32.gmra.mxu0 %v657
    %v772 = vpop.f32.mrf.mxu0
    %v773 = vadd.f32 0.0, %v772
    %v774 = vpop.f32.mrf.mxu0
    %775 = vmatprep.mubr.f32.mxu0 0.0
    %776 = vmatmul.mubr.f32.gmra.mxu0 %v659
    %v777 = vpop.f32.mrf.mxu0
    %v778 = vadd.f32 0.0, %v777
    %v779 = vpop.f32.mrf.mxu0
    %780 = vdwg.mxu0
    %v781 = vxor.u32 %v743, 2147483648
    %v782 = vxor.u32 %v748, 2147483648
    %v783 = vxor.u32 %v753, 2147483648
    %v784 = vxor.u32 %v758, 2147483648
    %v785 = vxor.u32 %v763, 2147483648
    %v786 = vxor.u32 %v768, 2147483648
    %v787 = vxor.u32 %v773, 2147483648
    %v788 = vxor.u32 %v778, 2147483648
    %v789 = vmul.f32 %v781, 1.442695
    %v790 = vpow.pop %v789
    %v791 = vmul.f32 %v782, 1.442695
    %v792 = vpow.pop %v791
    %v793 = vmul.f32 %v783, 1.442695
    %v794 = vpow.pop %v793
    %v795 = vmul.f32 %v784, 1.442695
    %v796 = vpow.pop %v795
    %v797 = vmul.f32 %v785, 1.442695
    %v798 = vpow.pop %v797
    %v799 = vmul.f32 %v786, 1.442695
    %v800 = vpow.pop %v799
    %v801 = vmul.f32 %v787, 1.442695
    %v802 = vpow.pop %v801
    %v803 = vmul.f32 %v788, 1.442695
    %v804 = vpow.pop %v803
    %v805 = vadd.f32 %v790, 1.0
    %v806 = vadd.f32 %v792, 1.0
    %v807 = vadd.f32 %v794, 1.0
    %v808 = vadd.f32 %v796, 1.0
    %v809 = vadd.f32 %v798, 1.0
    %v810 = vadd.f32 %v800, 1.0
    %v811 = vadd.f32 %v802, 1.0
    %v812 = vadd.f32 %v804, 1.0
    %v813 = vrcp.pop %v805
    %v814 = vmul.f32 1.0, %v813
    %v815 = vrcp.pop %v806
    %v816 = vmul.f32 1.0, %v815
    %v817 = vrcp.pop %v807
    %v818 = vmul.f32 1.0, %v817
    %v819 = vrcp.pop %v808
    %v820 = vmul.f32 1.0, %v819
    %v821 = vrcp.pop %v809
    %v822 = vmul.f32 1.0, %v821
    %v823 = vrcp.pop %v810
    %v824 = vmul.f32 1.0, %v823
    %v825 = vrcp.pop %v811
    %v826 = vmul.f32 1.0, %v825
    %v827 = vrcp.pop %v812
    %v828 = vmul.f32 1.0, %v827
    %v829 = vld [vmem:[%s3] sm:$0xff]
    %v830 = vld [vmem:[%s3 + $0x8] sm:$0xff]
    %v831 = vld [vmem:[%s3 + $0x10] sm:$0xff]
    %v832 = vld [vmem:[%s3 + $0x18] sm:$0xff]
    %v833 = vld [vmem:[%s3 + $0x20] sm:$0xff]
    %v834 = vld [vmem:[%s3 + $0x28] sm:$0xff]
    %v835 = vld [vmem:[%s3 + $0x30] sm:$0xff]
    %v836 = vld [vmem:[%s3 + $0x38] sm:$0xff]
    %vm837 = vcmask 523264
    %v839 = vsel %vm837, %v814, 0
    %v842 = vsel %vm837, %v816, 0
    %v845 = vsel %vm837, %v818, 0
    %v848 = vsel %vm837, %v820, 0
    %v851 = vsel %vm837, %v822, 0
    %v854 = vsel %vm837, %v824, 0
    %v857 = vsel %vm837, %v826, 0
    %v860 = vsel %vm837, %v828, 0
    %862 = vmatprep.subr.mxu0 0.0
    %863 = vmatpush1.msra.mxu0 0.0
    %864 = vmatprep.subr.mxu0 0.0
    %865 = vmatpush1.msra.mxu0 0.0
    %866 = vmatprep.subr.mxu0 0.0
    %867 = vmatpush1.msra.mxu0 0.0
    %868 = vmatprep.subr.mxu0 0.0
    %869 = vmatpush1.msra.mxu0 0.0
    %870 = vmatprep.subr.mxu0 0.0
    %871 = vmatpush1.msra.mxu0 0.0
    %872 = vmatprep.subr.mxu0 0.0
    %873 = vmatpush1.msra.mxu0 0.0
    %874 = vmatprep.subr.mxu0 0.0
    %875 = vmatpush1.msra.mxu0 0.0
    %876 = vmatprep.subr.mxu0 0.0
    %877 = vmatpush1.msra.mxu0 0.0
    %878 = vmatprep.subr.mxu0 0.0
    %879 = vmatpush1.msra.mxu0 %v836
    %880 = vmatprep.subr.mxu0 0.0
    %881 = vmatpush1.msra.mxu0 %v835
    %882 = vmatprep.subr.mxu0 0.0
    %883 = vmatpush1.msra.mxu0 %v834
    %884 = vmatprep.subr.mxu0 0.0
    %885 = vmatpush1.msra.mxu0 %v833
    %886 = vmatprep.subr.mxu0 0.0
    %887 = vmatpush1.msra.mxu0 %v832
    %888 = vmatprep.subr.mxu0 0.0
    %889 = vmatpush1.msra.mxu0 %v831
    %890 = vmatprep.subr.mxu0 0.0
    %891 = vmatpush1.msra.mxu0 %v830
    %892 = vmatprep.subr.mxu0 0.0
    %893 = vmatpush1.msra.mxu0 %v829
    %894 = vmatprep.subr.mxu0 0.0
    %895 = vmatpush2.msra.mxu0 0.0
    %896 = vmatprep.subr.mxu0 0.0
    %897 = vmatpush2.msra.mxu0 0.0
    %898 = vmatprep.subr.mxu0 0.0
    %899 = vmatpush2.msra.mxu0 0.0
    %900 = vmatprep.subr.mxu0 0.0
    %901 = vmatpush2.msra.mxu0 0.0
    %902 = vmatprep.subr.mxu0 0.0
    %903 = vmatpush2.msra.mxu0 0.0
    %904 = vmatprep.subr.mxu0 0.0
    %905 = vmatpush2.msra.mxu0 0.0
    %906 = vmatprep.subr.mxu0 0.0
    %907 = vmatpush2.msra.mxu0 0.0
    %908 = vmatprep.subr.mxu0 0.0
    %909 = vmatpush2.msra.mxu0 0.0
    %910 = vmatprep.subr.mxu0 0.0
    %911 = vmatpush2.msra.mxu0 0.0
    %912 = vmatprep.subr.mxu0 0.0
    %913 = vmatpush2.msra.mxu0 0.0
    %914 = vmatprep.subr.mxu0 0.0
    %915 = vmatpush2.msra.mxu0 0.0
    %916 = vmatprep.subr.mxu0 0.0
    %917 = vmatpush2.msra.mxu0 0.0
    %918 = vmatprep.subr.mxu0 0.0
    %919 = vmatpush2.msra.mxu0 0.0
    %920 = vmatprep.subr.mxu0 0.0
    %921 = vmatpush2.msra.mxu0 0.0
    %922 = vmatprep.subr.mxu0 0.0
    %923 = vmatpush2.msra.mxu0 0.0
    %924 = vmatprep.subr.mxu0 0.0
    %925 = vmatpush2.msra.mxu0 0.0
    %926 = vmatprep.mubr.f32.mxu0 0.0
    %927 = vmatmul.mubr.f32.gmra.mxu0 %v839
    %v928 = vpop.f32.mrf.mxu0
    %v929 = vadd.f32 0.0, %v928
    %v930 = vpop.f32.mrf.mxu0
    %931 = vmatprep.mubr.f32.mxu0 0.0
    %932 = vmatmul.mubr.f32.gmra.mxu0 %v842
    %v933 = vpop.f32.mrf.mxu0
    %v934 = vadd.f32 0.0, %v933
    %v935 = vpop.f32.mrf.mxu0
    %936 = vmatprep.mubr.f32.mxu0 0.0
    %937 = vmatmul.mubr.f32.gmra.mxu0 %v845
    %v938 = vpop.f32.mrf.mxu0
    %v939 = vadd.f32 0.0, %v938
    %v940 = vpop.f32.mrf.mxu0
    %941 = vmatprep.mubr.f32.mxu0 0.0
    %942 = vmatmul.mubr.f32.gmra.mxu0 %v848
    %v943 = vpop.f32.mrf.mxu0
    %v944 = vadd.f32 0.0, %v943
    %v945 = vpop.f32.mrf.mxu0
    %946 = vmatprep.mubr.f32.mxu0 0.0
    %947 = vmatmul.mubr.f32.gmra.mxu0 %v851
    %v948 = vpop.f32.mrf.mxu0
    %v949 = vadd.f32 0.0, %v948
    %v950 = vpop.f32.mrf.mxu0
    %951 = vmatprep.mubr.f32.mxu0 0.0
    %952 = vmatmul.mubr.f32.gmra.mxu0 %v854
    %v953 = vpop.f32.mrf.mxu0
    %v954 = vadd.f32 0.0, %v953
    %v955 = vpop.f32.mrf.mxu0
    %956 = vmatprep.mubr.f32.mxu0 0.0
    %957 = vmatmul.mubr.f32.gmra.mxu0 %v857
    %v958 = vpop.f32.mrf.mxu0
    %v959 = vadd.f32 0.0, %v958
    %v960 = vpop.f32.mrf.mxu0
    %961 = vmatprep.mubr.f32.mxu0 0.0
    %962 = vmatmul.mubr.f32.gmra.mxu0 %v860
    %v963 = vpop.f32.mrf.mxu0
    %v964 = vadd.f32 0.0, %v963
    %v965 = vpop.f32.mrf.mxu0
    %966 = vdwg.mxu0
    %v967 = vtanh.pop %v929
    %v968 = vtanh.pop %v934
    %v969 = vtanh.pop %v939
    %v970 = vtanh.pop %v944
    %v971 = vtanh.pop %v949
    %v972 = vtanh.pop %v954
    %v973 = vtanh.pop %v959
    %v974 = vtanh.pop %v964
    %v975 = vld [vmem:[%s4] sm:$0xff]
    %v976 = vld [vmem:[%s4 + $0x8] sm:$0xff]
    %v977 = vld [vmem:[%s4 + $0x10] sm:$0xff]
    %v978 = vld [vmem:[%s4 + $0x18] sm:$0xff]
    %v979 = vld [vmem:[%s4 + $0x20] sm:$0xff]
    %v980 = vld [vmem:[%s4 + $0x28] sm:$0xff]
    %v981 = vld [vmem:[%s4 + $0x30] sm:$0xff]
    %v982 = vld [vmem:[%s4 + $0x38] sm:$0xff]
    %v984 = vsel %vm837, %v967, 0
    %v987 = vsel %vm837, %v968, 0
    %v990 = vsel %vm837, %v969, 0
    %v993 = vsel %vm837, %v970, 0
    %v996 = vsel %vm837, %v971, 0
    %v999 = vsel %vm837, %v972, 0
    %v1002 = vsel %vm837, %v973, 0
    %v1005 = vsel %vm837, %v974, 0
    %1007 = vmatprep.subr.mxu0 0.0
    %1008 = vmatpush1.msra.mxu0 0.0
    %1009 = vmatprep.subr.mxu0 0.0
    %1010 = vmatpush1.msra.mxu0 0.0
    %1011 = vmatprep.subr.mxu0 0.0
    %1012 = vmatpush1.msra.mxu0 0.0
    %1013 = vmatprep.subr.mxu0 0.0
    %1014 = vmatpush1.msra.mxu0 0.0
    %1015 = vmatprep.subr.mxu0 0.0
    %1016 = vmatpush1.msra.mxu0 0.0
    %1017 = vmatprep.subr.mxu0 0.0
    %1018 = vmatpush1.msra.mxu0 0.0
    %1019 = vmatprep.subr.mxu0 0.0
    %1020 = vmatpush1.msra.mxu0 0.0
    %1021 = vmatprep.subr.mxu0 0.0
    %1022 = vmatpush1.msra.mxu0 0.0
    %1023 = vmatprep.subr.mxu0 0.0
    %1024 = vmatpush1.msra.mxu0 %v982
    %1025 = vmatprep.subr.mxu0 0.0
    %1026 = vmatpush1.msra.mxu0 %v981
    %1027 = vmatprep.subr.mxu0 0.0
    %1028 = vmatpush1.msra.mxu0 %v980
    %1029 = vmatprep.subr.mxu0 0.0
    %1030 = vmatpush1.msra.mxu0 %v979
    %1031 = vmatprep.subr.mxu0 0.0
    %1032 = vmatpush1.msra.mxu0 %v978
    %1033 = vmatprep.subr.mxu0 0.0
    %1034 = vmatpush1.msra.mxu0 %v977
    %1035 = vmatprep.subr.mxu0 0.0
    %1036 = vmatpush1.msra.mxu0 %v976
    %1037 = vmatprep.subr.mxu0 0.0
    %1038 = vmatpush1.msra.mxu0 %v975
    %1039 = vmatprep.subr.mxu0 0.0
    %1040 = vmatpush2.msra.mxu0 0.0
    %1041 = vmatprep.subr.mxu0 0.0
    %1042 = vmatpush2.msra.mxu0 0.0
    %1043 = vmatprep.subr.mxu0 0.0
    %1044 = vmatpush2.msra.mxu0 0.0
    %1045 = vmatprep.subr.mxu0 0.0
    %1046 = vmatpush2.msra.mxu0 0.0
    %1047 = vmatprep.subr.mxu0 0.0
    %1048 = vmatpush2.msra.mxu0 0.0
    %1049 = vmatprep.subr.mxu0 0.0
    %1050 = vmatpush2.msra.mxu0 0.0
    %1051 = vmatprep.subr.mxu0 0.0
    %1052 = vmatpush2.msra.mxu0 0.0
    %1053 = vmatprep.subr.mxu0 0.0
    %1054 = vmatpush2.msra.mxu0 0.0
    %1055 = vmatprep.subr.mxu0 0.0
    %1056 = vmatpush2.msra.mxu0 0.0
    %1057 = vmatprep.subr.mxu0 0.0
    %1058 = vmatpush2.msra.mxu0 0.0
    %1059 = vmatprep.subr.mxu0 0.0
    %1060 = vmatpush2.msra.mxu0 0.0
    %1061 = vmatprep.subr.mxu0 0.0
    %1062 = vmatpush2.msra.mxu0 0.0
    %1063 = vmatprep.subr.mxu0 0.0
    %1064 = vmatpush2.msra.mxu0 0.0
    %1065 = vmatprep.subr.mxu0 0.0
    %1066 = vmatpush2.msra.mxu0 0.0
    %1067 = vmatprep.subr.mxu0 0.0
    %1068 = vmatpush2.msra.mxu0 0.0
    %1069 = vmatprep.subr.mxu0 0.0
    %1070 = vmatpush2.msra.mxu0 0.0
    %1071 = vmatprep.mubr.f32.mxu0 0.0
    %1072 = vmatmul.mubr.f32.gmra.mxu0 %v984
    %v1073 = vpop.f32.mrf.mxu0
    %v1074 = vadd.f32 0.0, %v1073
    %v1075 = vpop.f32.mrf.mxu0
    %1076 = vmatprep.mubr.f32.mxu0 0.0
    %1077 = vmatmul.mubr.f32.gmra.mxu0 %v987
    %v1078 = vpop.f32.mrf.mxu0
    %v1079 = vadd.f32 0.0, %v1078
    %v1080 = vpop.f32.mrf.mxu0
    %1081 = vmatprep.mubr.f32.mxu0 0.0
    %1082 = vmatmul.mubr.f32.gmra.mxu0 %v990
    %v1083 = vpop.f32.mrf.mxu0
    %v1084 = vadd.f32 0.0, %v1083
    %v1085 = vpop.f32.mrf.mxu0
    %1086 = vmatprep.mubr.f32.mxu0 0.0
    %1087 = vmatmul.mubr.f32.gmra.mxu0 %v993
    %v1088 = vpop.f32.mrf.mxu0
    %v1089 = vadd.f32 0.0, %v1088
    %v1090 = vpop.f32.mrf.mxu0
    %1091 = vmatprep.mubr.f32.mxu0 0.0
    %1092 = vmatmul.mubr.f32.gmra.mxu0 %v996
    %v1093 = vpop.f32.mrf.mxu0
    %v1094 = vadd.f32 0.0, %v1093
    %v1095 = vpop.f32.mrf.mxu0
    %1096 = vmatprep.mubr.f32.mxu0 0.0
    %1097 = vmatmul.mubr.f32.gmra.mxu0 %v999
    %v1098 = vpop.f32.mrf.mxu0
    %v1099 = vadd.f32 0.0, %v1098
    %v1100 = vpop.f32.mrf.mxu0
    %1101 = vmatprep.mubr.f32.mxu0 0.0
    %1102 = vmatmul.mubr.f32.gmra.mxu0 %v1002
    %v1103 = vpop.f32.mrf.mxu0
    %v1104 = vadd.f32 0.0, %v1103
    %v1105 = vpop.f32.mrf.mxu0
    %1106 = vmatprep.mubr.f32.mxu0 0.0
    %1107 = vmatmul.mubr.f32.gmra.mxu0 %v1005
    %v1108 = vpop.f32.mrf.mxu0
    %v1109 = vadd.f32 0.0, %v1108
    %v1110 = vpop.f32.mrf.mxu0
    %1111 = vdwg.mxu0
    %v1112 = vtanh.pop %v1074
    %v1113 = vtanh.pop %v1079
    %v1114 = vtanh.pop %v1084
    %v1115 = vtanh.pop %v1089
    %v1116 = vtanh.pop %v1094
    %v1117 = vtanh.pop %v1099
    %v1118 = vtanh.pop %v1104
    %v1119 = vtanh.pop %v1109
    %v1120 = vld [vmem:[%s5] sm:$0xff]
    %v1121 = vld [vmem:[%s5 + $0x8] sm:$0xff]
    %v1122 = vld [vmem:[%s5 + $0x10] sm:$0xff]
    %v1123 = vld [vmem:[%s5 + $0x18] sm:$0xff]
    %v1124 = vld [vmem:[%s5 + $0x20] sm:$0xff]
    %v1125 = vld [vmem:[%s5 + $0x28] sm:$0xff]
    %v1126 = vld [vmem:[%s5 + $0x30] sm:$0xff]
    %v1127 = vld [vmem:[%s5 + $0x38] sm:$0xff]
    %v1128 = vld [vmem:[%s5 + $0x40] sm:$0xff]
    %v1129 = vld [vmem:[%s5 + $0x48] sm:$0xff]
    %v1130 = vld [vmem:[%s5 + $0x50] sm:$0xff]
    %v1131 = vld [vmem:[%s5 + $0x58] sm:$0xff]
    %v1132 = vld [vmem:[%s5 + $0x60] sm:$0xff]
    %v1133 = vld [vmem:[%s5 + $0x68] sm:$0xff]
    %v1134 = vld [vmem:[%s5 + $0x70] sm:$0xff]
    %v1135 = vld [vmem:[%s5 + $0x78] sm:$0xff]
    %v1136 = vld [vmem:[%s5 + $0x80] sm:$0xff]
    %v1137 = vld [vmem:[%s5 + $0x88] sm:$0xff]
    %v1138 = vld [vmem:[%s5 + $0x90] sm:$0xff]
    %v1139 = vld [vmem:[%s5 + $0x98] sm:$0xff]
    %v1140 = vld [vmem:[%s5 + $0xa0] sm:$0xff]
    %v1141 = vld [vmem:[%s5 + $0xa8] sm:$0xff]
    %v1142 = vld [vmem:[%s5 + $0xb0] sm:$0xff]
    %v1143 = vld [vmem:[%s5 + $0xb8] sm:$0xff]
    %v1144 = vld [vmem:[%s5 + $0xc0] sm:$0xff]
    %v1145 = vld [vmem:[%s5 + $0xc8] sm:$0xff]
    %v1146 = vld [vmem:[%s5 + $0xd0] sm:$0xff]
    %v1147 = vld [vmem:[%s5 + $0xd8] sm:$0xff]
    %v1148 = vld [vmem:[%s5 + $0xe0] sm:$0xff]
    %v1149 = vld [vmem:[%s5 + $0xe8] sm:$0xff]
    %v1150 = vld [vmem:[%s5 + $0xf0] sm:$0xff]
    %v1151 = vld [vmem:[%s5 + $0xf8] sm:$0xff]
    %v1152 = vld [vmem:[%s5 + $0x100] sm:$0xff]
    %v1153 = vld [vmem:[%s5 + $0x108] sm:$0xff]
    %v1154 = vld [vmem:[%s5 + $0x110] sm:$0xff]
    %v1155 = vld [vmem:[%s5 + $0x118] sm:$0xff]
    %v1156 = vld [vmem:[%s5 + $0x120] sm:$0xff]
    %v1157 = vld [vmem:[%s5 + $0x128] sm:$0xff]
    %v1158 = vld [vmem:[%s5 + $0x130] sm:$0xff]
    %v1159 = vld [vmem:[%s5 + $0x138] sm:$0xff]
    %v1160 = vld [vmem:[%s5 + $0x140] sm:$0xff]
    %v1161 = vld [vmem:[%s5 + $0x148] sm:$0xff]
    %v1162 = vld [vmem:[%s5 + $0x150] sm:$0xff]
    %v1163 = vld [vmem:[%s5 + $0x158] sm:$0xff]
    %v1164 = vld [vmem:[%s5 + $0x160] sm:$0xff]
    %v1165 = vld [vmem:[%s5 + $0x168] sm:$0xff]
    %v1166 = vld [vmem:[%s5 + $0x170] sm:$0xff]
    %v1167 = vld [vmem:[%s5 + $0x178] sm:$0xff]
    %v1168 = vld [vmem:[%s5 + $0x180] sm:$0xff]
    %v1169 = vld [vmem:[%s5 + $0x188] sm:$0xff]
    %v1170 = vld [vmem:[%s5 + $0x190] sm:$0xff]
    %v1171 = vld [vmem:[%s5 + $0x198] sm:$0xff]
    %v1172 = vld [vmem:[%s5 + $0x1a0] sm:$0xff]
    %v1173 = vld [vmem:[%s5 + $0x1a8] sm:$0xff]
    %v1174 = vld [vmem:[%s5 + $0x1b0] sm:$0xff]
    %v1175 = vld [vmem:[%s5 + $0x1b8] sm:$0xff]
    %v1176 = vld [vmem:[%s5 + $0x1c0] sm:$0xff]
    %v1177 = vld [vmem:[%s5 + $0x1c8] sm:$0xff]
    %v1178 = vld [vmem:[%s5 + $0x1d0] sm:$0xff]
    %v1179 = vld [vmem:[%s5 + $0x1d8] sm:$0xff]
    %v1180 = vld [vmem:[%s5 + $0x1e0] sm:$0xff]
    %v1181 = vld [vmem:[%s5 + $0x1e8] sm:$0xff]
    %v1182 = vld [vmem:[%s5 + $0x1f0] sm:$0xff]
    %v1183 = vld [vmem:[%s5 + $0x1f8] sm:$0xff]
    %v1184 = vld [vmem:[%s5 + $0x200] sm:$0xff]
    %v1185 = vld [vmem:[%s5 + $0x208] sm:$0xff]
    %v1186 = vld [vmem:[%s5 + $0x210] sm:$0xff]
    %v1187 = vld [vmem:[%s5 + $0x218] sm:$0xff]
    %v1188 = vld [vmem:[%s5 + $0x220] sm:$0xff]
    %v1189 = vld [vmem:[%s5 + $0x228] sm:$0xff]
    %v1190 = vld [vmem:[%s5 + $0x230] sm:$0xff]
    %v1191 = vld [vmem:[%s5 + $0x238] sm:$0xff]
    %v1192 = vld [vmem:[%s5 + $0x240] sm:$0xff]
    %v1193 = vld [vmem:[%s5 + $0x248] sm:$0xff]
    %v1194 = vld [vmem:[%s5 + $0x250] sm:$0xff]
    %v1195 = vld [vmem:[%s5 + $0x258] sm:$0xff]
    %v1196 = vld [vmem:[%s5 + $0x260] sm:$0xff]
    %v1197 = vld [vmem:[%s5 + $0x268] sm:$0xff]
    %v1198 = vld [vmem:[%s5 + $0x270] sm:$0xff]
    %v1199 = vld [vmem:[%s5 + $0x278] sm:$0xff]
    %v1200 = vld [vmem:[%s5 + $0x280] sm:$0xff]
    %v1201 = vld [vmem:[%s5 + $0x288] sm:$0xff]
    %v1202 = vld [vmem:[%s5 + $0x290] sm:$0xff]
    %v1203 = vld [vmem:[%s5 + $0x298] sm:$0xff]
    %v1204 = vld [vmem:[%s5 + $0x2a0] sm:$0xff]
    %v1205 = vld [vmem:[%s5 + $0x2a8] sm:$0xff]
    %v1206 = vld [vmem:[%s5 + $0x2b0] sm:$0xff]
    %v1207 = vld [vmem:[%s5 + $0x2b8] sm:$0xff]
    %v1208 = vld [vmem:[%s5 + $0x2c0] sm:$0xff]
    %v1209 = vld [vmem:[%s5 + $0x2c8] sm:$0xff]
    %v1210 = vld [vmem:[%s5 + $0x2d0] sm:$0xff]
    %v1211 = vld [vmem:[%s5 + $0x2d8] sm:$0xff]
    %v1212 = vld [vmem:[%s5 + $0x2e0] sm:$0xff]
    %v1213 = vld [vmem:[%s5 + $0x2e8] sm:$0xff]
    %v1214 = vld [vmem:[%s5 + $0x2f0] sm:$0xff]
    %v1215 = vld [vmem:[%s5 + $0x2f8] sm:$0xff]
    %v1216 = vld [vmem:[%s5 + $0x300] sm:$0xff]
    %v1217 = vld [vmem:[%s5 + $0x308] sm:$0xff]
    %v1218 = vld [vmem:[%s5 + $0x310] sm:$0xff]
    %v1219 = vld [vmem:[%s5 + $0x318] sm:$0xff]
    %v1220 = vld [vmem:[%s5 + $0x320] sm:$0xff]
    %v1221 = vld [vmem:[%s5 + $0x328] sm:$0xff]
    %v1222 = vld [vmem:[%s5 + $0x330] sm:$0xff]
    %v1223 = vld [vmem:[%s5 + $0x338] sm:$0xff]
    %v1224 = vld [vmem:[%s5 + $0x340] sm:$0xff]
    %v1225 = vld [vmem:[%s5 + $0x348] sm:$0xff]
    %v1226 = vld [vmem:[%s5 + $0x350] sm:$0xff]
    %v1227 = vld [vmem:[%s5 + $0x358] sm:$0xff]
    %v1228 = vld [vmem:[%s5 + $0x360] sm:$0xff]
    %v1229 = vld [vmem:[%s5 + $0x368] sm:$0xff]
    %v1230 = vld [vmem:[%s5 + $0x370] sm:$0xff]
    %v1231 = vld [vmem:[%s5 + $0x378] sm:$0xff]
    %1232 = vmatprep.subr.mxu0 %v1226
    %1233 = vmatpush1.msra.mxu0 %v1225
    %1234 = vmatprep.subr.mxu0 %v1219
    %1235 = vmatpush1.msra.mxu0 %v1218
    %1236 = vmatprep.subr.mxu0 %v1212
    %1237 = vmatpush1.msra.mxu0 %v1211
    %1238 = vmatprep.subr.mxu0 %v1205
    %1239 = vmatpush1.msra.mxu0 %v1204
    %1240 = vmatprep.subr.mxu0 %v1198
    %1241 = vmatpush1.msra.mxu0 %v1197
    %1242 = vmatprep.subr.mxu0 %v1191
    %1243 = vmatpush1.msra.mxu0 %v1190
    %1244 = vmatprep.subr.mxu0 %v1184
    %1245 = vmatpush1.msra.mxu0 %v1183
    %1246 = vmatprep.subr.mxu0 %v1177
    %1247 = vmatpush1.msra.mxu0 %v1176
    %1248 = vmatprep.subr.mxu0 %v1170
    %1249 = vmatpush1.msra.mxu0 %v1169
    %1250 = vmatprep.subr.mxu0 %v1163
    %1251 = vmatpush1.msra.mxu0 %v1162
    %1252 = vmatprep.subr.mxu0 %v1156
    %1253 = vmatpush1.msra.mxu0 %v1155
    %1254 = vmatprep.subr.mxu0 %v1149
    %1255 = vmatpush1.msra.mxu0 %v1148
    %1256 = vmatprep.subr.mxu0 %v1142
    %1257 = vmatpush1.msra.mxu0 %v1141
    %1258 = vmatprep.subr.mxu0 %v1135
    %1259 = vmatpush1.msra.mxu0 %v1134
    %1260 = vmatprep.subr.mxu0 %v1128
    %1261 = vmatpush1.msra.mxu0 %v1127
    %1262 = vmatprep.subr.mxu0 %v1121
    %1263 = vmatpush1.msra.mxu0 %v1120
    %1264 = vmatprep.subr.mxu0 0.0
    %1265 = vmatpush2.msra.mxu0 0.0
    %1266 = vmatprep.subr.mxu0 0.0
    %1267 = vmatpush2.msra.mxu0 0.0
    %1268 = vmatprep.subr.mxu0 0.0
    %1269 = vmatpush2.msra.mxu0 0.0
    %1270 = vmatprep.subr.mxu0 0.0
    %1271 = vmatpush2.msra.mxu0 0.0
    %1272 = vmatprep.subr.mxu0 0.0
    %1273 = vmatpush2.msra.mxu0 0.0
    %1274 = vmatprep.subr.mxu0 0.0
    %1275 = vmatpush2.msra.mxu0 0.0
    %1276 = vmatprep.subr.mxu0 0.0
    %1277 = vmatpush2.msra.mxu0 0.0
    %1278 = vmatprep.subr.mxu0 0.0
    %1279 = vmatpush2.msra.mxu0 0.0
    %1280 = vmatprep.subr.mxu0 0.0
    %1281 = vmatpush2.msra.mxu0 0.0
    %1282 = vmatprep.subr.mxu0 0.0
    %1283 = vmatpush2.msra.mxu0 0.0
    %1284 = vmatprep.subr.mxu0 0.0
    %1285 = vmatpush2.msra.mxu0 0.0
    %1286 = vmatprep.subr.mxu0 0.0
    %1287 = vmatpush2.msra.mxu0 0.0
    %1288 = vmatprep.subr.mxu0 0.0
    %1289 = vmatpush2.msra.mxu0 0.0
    %1290 = vmatprep.subr.mxu0 0.0
    %1291 = vmatpush2.msra.mxu0 0.0
    %1292 = vmatprep.subr.mxu0 0.0
    %1293 = vmatpush2.msra.mxu0 0.0
    %1294 = vmatprep.subr.mxu0 0.0
    %1295 = vmatpush2.msra.mxu0 0.0
    %1296 = vmatprep.mubr.f32.mxu0 0.0
    %1297 = vmatmul.mubr.f32.gmra.mxu0 %v1112
    %v1298 = vpop.f32.mrf.mxu0
    %v1299 = vadd.f32 0.0, %v1298
    %v1300 = vpop.f32.mrf.mxu0
    %v1301 = vadd.f32 0.0, %v1300
    %1302 = vmatprep.mubr.f32.mxu0 0.0
    %1303 = vmatmul.mubr.f32.gmra.mxu0 %v1113
    %v1304 = vpop.f32.mrf.mxu0
    %v1305 = vadd.f32 0.0, %v1304
    %v1306 = vpop.f32.mrf.mxu0
    %v1307 = vadd.f32 0.0, %v1306
    %1308 = vmatprep.mubr.f32.mxu0 0.0
    %1309 = vmatmul.mubr.f32.gmra.mxu0 %v1114
    %v1310 = vpop.f32.mrf.mxu0
    %v1311 = vadd.f32 0.0, %v1310
    %v1312 = vpop.f32.mrf.mxu0
    %v1313 = vadd.f32 0.0, %v1312
    %1314 = vmatprep.mubr.f32.mxu0 0.0
    %1315 = vmatmul.mubr.f32.gmra.mxu0 %v1115
    %v1316 = vpop.f32.mrf.mxu0
    %v1317 = vadd.f32 0.0, %v1316
    %v1318 = vpop.f32.mrf.mxu0
    %v1319 = vadd.f32 0.0, %v1318
    %1320 = vmatprep.mubr.f32.mxu0 0.0
    %1321 = vmatmul.mubr.f32.gmra.mxu0 %v1116
    %v1322 = vpop.f32.mrf.mxu0
    %v1323 = vadd.f32 0.0, %v1322
    %v1324 = vpop.f32.mrf.mxu0
    %v1325 = vadd.f32 0.0, %v1324
    %1326 = vmatprep.mubr.f32.mxu0 0.0
    %1327 = vmatmul.mubr.f32.gmra.mxu0 %v1117
    %v1328 = vpop.f32.mrf.mxu0
    %v1329 = vadd.f32 0.0, %v1328
    %v1330 = vpop.f32.mrf.mxu0
    %v1331 = vadd.f32 0.0, %v1330
    %1332 = vmatprep.mubr.f32.mxu0 0.0
    %1333 = vmatmul.mubr.f32.gmra.mxu0 %v1118
    %v1334 = vpop.f32.mrf.mxu0
    %v1335 = vadd.f32 0.0, %v1334
    %v1336 = vpop.f32.mrf.mxu0
    %v1337 = vadd.f32 0.0, %v1336
    %1338 = vmatprep.mubr.f32.mxu0 0.0
    %1339 = vmatmul.mubr.f32.gmra.mxu0 %v1119
    %v1340 = vpop.f32.mrf.mxu0
    %v1341 = vadd.f32 0.0, %v1340
    %v1342 = vpop.f32.mrf.mxu0
    %v1343 = vadd.f32 0.0, %v1342
    %1344 = vdwg.mxu0
    %1345 = vmatprep.subr.mxu0 %v1228
    %1346 = vmatpush1.msra.mxu0 %v1227
    %1347 = vmatprep.subr.mxu0 %v1221
    %1348 = vmatpush1.msra.mxu0 %v1220
    %1349 = vmatprep.subr.mxu0 %v1214
    %1350 = vmatpush1.msra.mxu0 %v1213
    %1351 = vmatprep.subr.mxu0 %v1207
    %1352 = vmatpush1.msra.mxu0 %v1206
    %1353 = vmatprep.subr.mxu0 %v1200
    %1354 = vmatpush1.msra.mxu0 %v1199
    %1355 = vmatprep.subr.mxu0 %v1193
    %1356 = vmatpush1.msra.mxu0 %v1192
    %1357 = vmatprep.subr.mxu0 %v1186
    %1358 = vmatpush1.msra.mxu0 %v1185
    %1359 = vmatprep.subr.mxu0 %v1179
    %1360 = vmatpush1.msra.mxu0 %v1178
    %1361 = vmatprep.subr.mxu0 %v1172
    %1362 = vmatpush1.msra.mxu0 %v1171
    %1363 = vmatprep.subr.mxu0 %v1165
    %1364 = vmatpush1.msra.mxu0 %v1164
    %1365 = vmatprep.subr.mxu0 %v1158
    %1366 = vmatpush1.msra.mxu0 %v1157
    %1367 = vmatprep.subr.mxu0 %v1151
    %1368 = vmatpush1.msra.mxu0 %v1150
    %1369 = vmatprep.subr.mxu0 %v1144
    %1370 = vmatpush1.msra.mxu0 %v1143
    %1371 = vmatprep.subr.mxu0 %v1137
    %1372 = vmatpush1.msra.mxu0 %v1136
    %1373 = vmatprep.subr.mxu0 %v1130
    %1374 = vmatpush1.msra.mxu0 %v1129
    %1375 = vmatprep.subr.mxu0 %v1123
    %1376 = vmatpush1.msra.mxu0 %v1122
    %1377 = vmatprep.subr.mxu0 0.0
    %1378 = vmatpush2.msra.mxu0 0.0
    %1379 = vmatprep.subr.mxu0 0.0
    %1380 = vmatpush2.msra.mxu0 0.0
    %1381 = vmatprep.subr.mxu0 0.0
    %1382 = vmatpush2.msra.mxu0 0.0
    %1383 = vmatprep.subr.mxu0 0.0
    %1384 = vmatpush2.msra.mxu0 0.0
    %1385 = vmatprep.subr.mxu0 0.0
    %1386 = vmatpush2.msra.mxu0 0.0
    %1387 = vmatprep.subr.mxu0 0.0
    %1388 = vmatpush2.msra.mxu0 0.0
    %1389 = vmatprep.subr.mxu0 0.0
    %1390 = vmatpush2.msra.mxu0 0.0
    %1391 = vmatprep.subr.mxu0 0.0
    %1392 = vmatpush2.msra.mxu0 0.0
    %1393 = vmatprep.subr.mxu0 0.0
    %1394 = vmatpush2.msra.mxu0 0.0
    %1395 = vmatprep.subr.mxu0 0.0
    %1396 = vmatpush2.msra.mxu0 0.0
    %1397 = vmatprep.subr.mxu0 0.0
    %1398 = vmatpush2.msra.mxu0 0.0
    %1399 = vmatprep.subr.mxu0 0.0
    %1400 = vmatpush2.msra.mxu0 0.0
    %1401 = vmatprep.subr.mxu0 0.0
    %1402 = vmatpush2.msra.mxu0 0.0
    %1403 = vmatprep.subr.mxu0 0.0
    %1404 = vmatpush2.msra.mxu0 0.0
    %1405 = vmatprep.subr.mxu0 0.0
    %1406 = vmatpush2.msra.mxu0 0.0
    %1407 = vmatprep.subr.mxu0 0.0
    %1408 = vmatpush2.msra.mxu0 0.0
    %1409 = vmatprep.mubr.f32.mxu0 0.0
    %1410 = vmatmul.mubr.f32.gmra.mxu0 %v1112
    %v1411 = vpop.f32.mrf.mxu0
    %v1412 = vadd.f32 0.0, %v1411
    %v1413 = vpop.f32.mrf.mxu0
    %v1414 = vadd.f32 0.0, %v1413
    %1415 = vmatprep.mubr.f32.mxu0 0.0
    %1416 = vmatmul.mubr.f32.gmra.mxu0 %v1113
    %v1417 = vpop.f32.mrf.mxu0
    %v1418 = vadd.f32 0.0, %v1417
    %v1419 = vpop.f32.mrf.mxu0
    %v1420 = vadd.f32 0.0, %v1419
    %1421 = vmatprep.mubr.f32.mxu0 0.0
    %1422 = vmatmul.mubr.f32.gmra.mxu0 %v1114
    %v1423 = vpop.f32.mrf.mxu0
    %v1424 = vadd.f32 0.0, %v1423
    %v1425 = vpop.f32.mrf.mxu0
    %v1426 = vadd.f32 0.0, %v1425
    %1427 = vmatprep.mubr.f32.mxu0 0.0
    %1428 = vmatmul.mubr.f32.gmra.mxu0 %v1115
    %v1429 = vpop.f32.mrf.mxu0
    %v1430 = vadd.f32 0.0, %v1429
    %v1431 = vpop.f32.mrf.mxu0
    %v1432 = vadd.f32 0.0, %v1431
    %1433 = vmatprep.mubr.f32.mxu0 0.0
    %1434 = vmatmul.mubr.f32.gmra.mxu0 %v1116
    %v1435 = vpop.f32.mrf.mxu0
    %v1436 = vadd.f32 0.0, %v1435
    %v1437 = vpop.f32.mrf.mxu0
    %v1438 = vadd.f32 0.0, %v1437
    %1439 = vmatprep.mubr.f32.mxu0 0.0
    %1440 = vmatmul.mubr.f32.gmra.mxu0 %v1117
    %v1441 = vpop.f32.mrf.mxu0
    %v1442 = vadd.f32 0.0, %v1441
    %v1443 = vpop.f32.mrf.mxu0
    %v1444 = vadd.f32 0.0, %v1443
    %1445 = vmatprep.mubr.f32.mxu0 0.0
    %1446 = vmatmul.mubr.f32.gmra.mxu0 %v1118
    %v1447 = vpop.f32.mrf.mxu0
    %v1448 = vadd.f32 0.0, %v1447
    %v1449 = vpop.f32.mrf.mxu0
    %v1450 = vadd.f32 0.0, %v1449
    %1451 = vmatprep.mubr.f32.mxu0 0.0
    %1452 = vmatmul.mubr.f32.gmra.mxu0 %v1119
    %v1453 = vpop.f32.mrf.mxu0
    %v1454 = vadd.f32 0.0, %v1453
    %v1455 = vpop.f32.mrf.mxu0
    %v1456 = vadd.f32 0.0, %v1455
    %1457 = vdwg.mxu0
    %1458 = vmatprep.subr.mxu0 %v1230
    %1459 = vmatpush1.msra.mxu0 %v1229
    %1460 = vmatprep.subr.mxu0 %v1223
    %1461 = vmatpush1.msra.mxu0 %v1222
    %1462 = vmatprep.subr.mxu0 %v1216
    %1463 = vmatpush1.msra.mxu0 %v1215
    %1464 = vmatprep.subr.mxu0 %v1209
    %1465 = vmatpush1.msra.mxu0 %v1208
    %1466 = vmatprep.subr.mxu0 %v1202
    %1467 = vmatpush1.msra.mxu0 %v1201
    %1468 = vmatprep.subr.mxu0 %v1195
    %1469 = vmatpush1.msra.mxu0 %v1194
    %1470 = vmatprep.subr.mxu0 %v1188
    %1471 = vmatpush1.msra.mxu0 %v1187
    %1472 = vmatprep.subr.mxu0 %v1181
    %1473 = vmatpush1.msra.mxu0 %v1180
    %1474 = vmatprep.subr.mxu0 %v1174
    %1475 = vmatpush1.msra.mxu0 %v1173
    %1476 = vmatprep.subr.mxu0 %v1167
    %1477 = vmatpush1.msra.mxu0 %v1166
    %1478 = vmatprep.subr.mxu0 %v1160
    %1479 = vmatpush1.msra.mxu0 %v1159
    %1480 = vmatprep.subr.mxu0 %v1153
    %1481 = vmatpush1.msra.mxu0 %v1152
    %1482 = vmatprep.subr.mxu0 %v1146
    %1483 = vmatpush1.msra.mxu0 %v1145
    %1484 = vmatprep.subr.mxu0 %v1139
    %1485 = vmatpush1.msra.mxu0 %v1138
    %1486 = vmatprep.subr.mxu0 %v1132
    %1487 = vmatpush1.msra.mxu0 %v1131
    %1488 = vmatprep.subr.mxu0 %v1125
    %1489 = vmatpush1.msra.mxu0 %v1124
    %1490 = vmatprep.subr.mxu0 0.0
    %1491 = vmatpush2.msra.mxu0 0.0
    %1492 = vmatprep.subr.mxu0 0.0
    %1493 = vmatpush2.msra.mxu0 0.0
    %1494 = vmatprep.subr.mxu0 0.0
    %1495 = vmatpush2.msra.mxu0 0.0
    %1496 = vmatprep.subr.mxu0 0.0
    %1497 = vmatpush2.msra.mxu0 0.0
    %1498 = vmatprep.subr.mxu0 0.0
    %1499 = vmatpush2.msra.mxu0 0.0
    %1500 = vmatprep.subr.mxu0 0.0
    %1501 = vmatpush2.msra.mxu0 0.0
    %1502 = vmatprep.subr.mxu0 0.0
    %1503 = vmatpush2.msra.mxu0 0.0
    %1504 = vmatprep.subr.mxu0 0.0
    %1505 = vmatpush2.msra.mxu0 0.0
    %1506 = vmatprep.subr.mxu0 0.0
    %1507 = vmatpush2.msra.mxu0 0.0
    %1508 = vmatprep.subr.mxu0 0.0
    %1509 = vmatpush2.msra.mxu0 0.0
    %1510 = vmatprep.subr.mxu0 0.0
    %1511 = vmatpush2.msra.mxu0 0.0
    %1512 = vmatprep.subr.mxu0 0.0
    %1513 = vmatpush2.msra.mxu0 0.0
    %1514 = vmatprep.subr.mxu0 0.0
    %1515 = vmatpush2.msra.mxu0 0.0
    %1516 = vmatprep.subr.mxu0 0.0
    %1517 = vmatpush2.msra.mxu0 0.0
    %1518 = vmatprep.subr.mxu0 0.0
    %1519 = vmatpush2.msra.mxu0 0.0
    %1520 = vmatprep.subr.mxu0 0.0
    %1521 = vmatpush2.msra.mxu0 0.0
    %1522 = vmatprep.mubr.f32.mxu0 0.0
    %1523 = vmatmul.mubr.f32.gmra.mxu0 %v1112
    %v1524 = vpop.f32.mrf.mxu0
    %v1525 = vadd.f32 0.0, %v1524
    %v1526 = vpop.f32.mrf.mxu0
    %v1527 = vadd.f32 0.0, %v1526
    %1528 = vmatprep.mubr.f32.mxu0 0.0
    %1529 = vmatmul.mubr.f32.gmra.mxu0 %v1113
    %v1530 = vpop.f32.mrf.mxu0
    %v1531 = vadd.f32 0.0, %v1530
    %v1532 = vpop.f32.mrf.mxu0
    %v1533 = vadd.f32 0.0, %v1532
    %1534 = vmatprep.mubr.f32.mxu0 0.0
    %1535 = vmatmul.mubr.f32.gmra.mxu0 %v1114
    %v1536 = vpop.f32.mrf.mxu0
    %v1537 = vadd.f32 0.0, %v1536
    %v1538 = vpop.f32.mrf.mxu0
    %v1539 = vadd.f32 0.0, %v1538
    %1540 = vmatprep.mubr.f32.mxu0 0.0
    %1541 = vmatmul.mubr.f32.gmra.mxu0 %v1115
    %v1542 = vpop.f32.mrf.mxu0
    %v1543 = vadd.f32 0.0, %v1542
    %v1544 = vpop.f32.mrf.mxu0
    %v1545 = vadd.f32 0.0, %v1544
    %1546 = vmatprep.mubr.f32.mxu0 0.0
    %1547 = vmatmul.mubr.f32.gmra.mxu0 %v1116
    %v1548 = vpop.f32.mrf.mxu0
    %v1549 = vadd.f32 0.0, %v1548
    %v1550 = vpop.f32.mrf.mxu0
    %v1551 = vadd.f32 0.0, %v1550
    %1552 = vmatprep.mubr.f32.mxu0 0.0
    %1553 = vmatmul.mubr.f32.gmra.mxu0 %v1117
    %v1554 = vpop.f32.mrf.mxu0
    %v1555 = vadd.f32 0.0, %v1554
    %v1556 = vpop.f32.mrf.mxu0
    %v1557 = vadd.f32 0.0, %v1556
    %1558 = vmatprep.mubr.f32.mxu0 0.0
    %1559 = vmatmul.mubr.f32.gmra.mxu0 %v1118
    %v1560 = vpop.f32.mrf.mxu0
    %v1561 = vadd.f32 0.0, %v1560
    %v1562 = vpop.f32.mrf.mxu0
    %v1563 = vadd.f32 0.0, %v1562
    %1564 = vmatprep.mubr.f32.mxu0 0.0
    %1565 = vmatmul.mubr.f32.gmra.mxu0 %v1119
    %v1566 = vpop.f32.mrf.mxu0
    %v1567 = vadd.f32 0.0, %v1566
    %v1568 = vpop.f32.mrf.mxu0
    %v1569 = vadd.f32 0.0, %v1568
    %1570 = vdwg.mxu0
    %1571 = vmatprep.subr.mxu0 0.0
    %1572 = vmatpush1.msra.mxu0 %v1231
    %1573 = vmatprep.subr.mxu0 0.0
    %1574 = vmatpush1.msra.mxu0 %v1224
    %1575 = vmatprep.subr.mxu0 0.0
    %1576 = vmatpush1.msra.mxu0 %v1217
    %1577 = vmatprep.subr.mxu0 0.0
    %1578 = vmatpush1.msra.mxu0 %v1210
    %1579 = vmatprep.subr.mxu0 0.0
    %1580 = vmatpush1.msra.mxu0 %v1203
    %1581 = vmatprep.subr.mxu0 0.0
    %1582 = vmatpush1.msra.mxu0 %v1196
    %1583 = vmatprep.subr.mxu0 0.0
    %1584 = vmatpush1.msra.mxu0 %v1189
    %1585 = vmatprep.subr.mxu0 0.0
    %1586 = vmatpush1.msra.mxu0 %v1182
    %1587 = vmatprep.subr.mxu0 0.0
    %1588 = vmatpush1.msra.mxu0 %v1175
    %1589 = vmatprep.subr.mxu0 0.0
    %1590 = vmatpush1.msra.mxu0 %v1168
    %1591 = vmatprep.subr.mxu0 0.0
    %1592 = vmatpush1.msra.mxu0 %v1161
    %1593 = vmatprep.subr.mxu0 0.0
    %1594 = vmatpush1.msra.mxu0 %v1154
    %1595 = vmatprep.subr.mxu0 0.0
    %1596 = vmatpush1.msra.mxu0 %v1147
    %1597 = vmatprep.subr.mxu0 0.0
    %1598 = vmatpush1.msra.mxu0 %v1140
    %1599 = vmatprep.subr.mxu0 0.0
    %1600 = vmatpush1.msra.mxu0 %v1133
    %1601 = vmatprep.subr.mxu0 0.0
    %1602 = vmatpush1.msra.mxu0 %v1126
    %1603 = vmatprep.subr.mxu0 0.0
    %1604 = vmatpush2.msra.mxu0 0.0
    %1605 = vmatprep.subr.mxu0 0.0
    %1606 = vmatpush2.msra.mxu0 0.0
    %1607 = vmatprep.subr.mxu0 0.0
    %1608 = vmatpush2.msra.mxu0 0.0
    %1609 = vmatprep.subr.mxu0 0.0
    %1610 = vmatpush2.msra.mxu0 0.0
    %1611 = vmatprep.subr.mxu0 0.0
    %1612 = vmatpush2.msra.mxu0 0.0
    %1613 = vmatprep.subr.mxu0 0.0
    %1614 = vmatpush2.msra.mxu0 0.0
    %1615 = vmatprep.subr.mxu0 0.0
    %1616 = vmatpush2.msra.mxu0 0.0
    %1617 = vmatprep.subr.mxu0 0.0
    %1618 = vmatpush2.msra.mxu0 0.0
    %1619 = vmatprep.subr.mxu0 0.0
    %1620 = vmatpush2.msra.mxu0 0.0
    %1621 = vmatprep.subr.mxu0 0.0
    %1622 = vmatpush2.msra.mxu0 0.0
    %1623 = vmatprep.subr.mxu0 0.0
    %1624 = vmatpush2.msra.mxu0 0.0
    %1625 = vmatprep.subr.mxu0 0.0
    %1626 = vmatpush2.msra.mxu0 0.0
    %1627 = vmatprep.subr.mxu0 0.0
    %1628 = vmatpush2.msra.mxu0 0.0
    %1629 = vmatprep.subr.mxu0 0.0
    %1630 = vmatpush2.msra.mxu0 0.0
    %1631 = vmatprep.subr.mxu0 0.0
    %1632 = vmatpush2.msra.mxu0 0.0
    %1633 = vmatprep.subr.mxu0 0.0
    %1634 = vmatpush2.msra.mxu0 0.0
    %1635 = vmatprep.mubr.f32.mxu0 0.0
    %1636 = vmatmul.mubr.f32.gmra.mxu0 %v1112
    %v1637 = vpop.f32.mrf.mxu0
    %v1638 = vadd.f32 0.0, %v1637
    %v1639 = vpop.f32.mrf.mxu0
    %1640 = vmatprep.mubr.f32.mxu0 0.0
    %1641 = vmatmul.mubr.f32.gmra.mxu0 %v1113
    %v1642 = vpop.f32.mrf.mxu0
    %v1643 = vadd.f32 0.0, %v1642
    %v1644 = vpop.f32.mrf.mxu0
    %1645 = vmatprep.mubr.f32.mxu0 0.0
    %1646 = vmatmul.mubr.f32.gmra.mxu0 %v1114
    %v1647 = vpop.f32.mrf.mxu0
    %v1648 = vadd.f32 0.0, %v1647
    %v1649 = vpop.f32.mrf.mxu0
    %1650 = vmatprep.mubr.f32.mxu0 0.0
    %1651 = vmatmul.mubr.f32.gmra.mxu0 %v1115
    %v1652 = vpop.f32.mrf.mxu0
    %v1653 = vadd.f32 0.0, %v1652
    %v1654 = vpop.f32.mrf.mxu0
    %1655 = vmatprep.mubr.f32.mxu0 0.0
    %1656 = vmatmul.mubr.f32.gmra.mxu0 %v1116
    %v1657 = vpop.f32.mrf.mxu0
    %v1658 = vadd.f32 0.0, %v1657
    %v1659 = vpop.f32.mrf.mxu0
    %1660 = vmatprep.mubr.f32.mxu0 0.0
    %1661 = vmatmul.mubr.f32.gmra.mxu0 %v1117
    %v1662 = vpop.f32.mrf.mxu0
    %v1663 = vadd.f32 0.0, %v1662
    %v1664 = vpop.f32.mrf.mxu0
    %1665 = vmatprep.mubr.f32.mxu0 0.0
    %1666 = vmatmul.mubr.f32.gmra.mxu0 %v1118
    %v1667 = vpop.f32.mrf.mxu0
    %v1668 = vadd.f32 0.0, %v1667
    %v1669 = vpop.f32.mrf.mxu0
    %1670 = vmatprep.mubr.f32.mxu0 0.0
    %1671 = vmatmul.mubr.f32.gmra.mxu0 %v1119
    %v1672 = vpop.f32.mrf.mxu0
    %v1673 = vadd.f32 0.0, %v1672
    %v1674 = vpop.f32.mrf.mxu0
    %1675 = vdwg.mxu0
    %v1676 = vtanh.pop %v1299
    %v1677 = vtanh.pop %v1301
    %v1678 = vtanh.pop %v1412
    %v1679 = vtanh.pop %v1414
    %v1680 = vtanh.pop %v1525
    %v1681 = vtanh.pop %v1527
    %v1682 = vtanh.pop %v1638
    %v1683 = vtanh.pop %v1305
    %v1684 = vtanh.pop %v1307
    %v1685 = vtanh.pop %v1418
    %v1686 = vtanh.pop %v1420
    %v1687 = vtanh.pop %v1531
    %v1688 = vtanh.pop %v1533
    %v1689 = vtanh.pop %v1643
    %v1690 = vtanh.pop %v1311
    %v1691 = vtanh.pop %v1313
    %v1692 = vtanh.pop %v1424
    %v1693 = vtanh.pop %v1426
    %v1694 = vtanh.pop %v1537
    %v1695 = vtanh.pop %v1539
    %v1696 = vtanh.pop %v1648
    %v1697 = vtanh.pop %v1317
    %v1698 = vtanh.pop %v1319
    %v1699 = vtanh.pop %v1430
    %v1700 = vtanh.pop %v1432
    %v1701 = vtanh.pop %v1543
    %v1702 = vtanh.pop %v1545
    %v1703 = vtanh.pop %v1653
    %v1704 = vtanh.pop %v1323
    %v1705 = vtanh.pop %v1325
    %v1706 = vtanh.pop %v1436
    %v1707 = vtanh.pop %v1438
    %v1708 = vtanh.pop %v1549
    %v1709 = vtanh.pop %v1551
    %v1710 = vtanh.pop %v1658
    %v1711 = vtanh.pop %v1329
    %v1712 = vtanh.pop %v1331
    %v1713 = vtanh.pop %v1442
    %v1714 = vtanh.pop %v1444
    %v1715 = vtanh.pop %v1555
    %v1716 = vtanh.pop %v1557
    %v1717 = vtanh.pop %v1663
    %v1718 = vtanh.pop %v1335
    %v1719 = vtanh.pop %v1337
    %v1720 = vtanh.pop %v1448
    %v1721 = vtanh.pop %v1450
    %v1722 = vtanh.pop %v1561
    %v1723 = vtanh.pop %v1563
    %v1724 = vtanh.pop %v1668
    %v1725 = vtanh.pop %v1341
    %v1726 = vtanh.pop %v1343
    %v1727 = vtanh.pop %v1454
    %v1728 = vtanh.pop %v1456
    %v1729 = vtanh.pop %v1567
    %v1730 = vtanh.pop %v1569
    %v1731 = vtanh.pop %v1673
    %1732 = vst [vmem:[#allocation2] sm:$0xff] %v1676
    %1733 = vst [vmem:[#allocation2 + $0x8] sm:$0xff] %v1677
    %1734 = vst [vmem:[#allocation2 + $0x10] sm:$0xff] %v1678
    %1735 = vst [vmem:[#allocation2 + $0x18] sm:$0xff] %v1679
    %1736 = vst [vmem:[#allocation2 + $0x20] sm:$0xff] %v1680
    %1737 = vst [vmem:[#allocation2 + $0x28] sm:$0xff] %v1681
    %1738 = vst [vmem:[#allocation2 + $0x30] sm:$0xff] %v1682
    %1739 = vst [vmem:[#allocation2 + $0x38] sm:$0xff] %v1683
    %1740 = vst [vmem:[#allocation2 + $0x40] sm:$0xff] %v1684
    %1741 = vst [vmem:[#allocation2 + $0x48] sm:$0xff] %v1685
    %1742 = vst [vmem:[#allocation2 + $0x50] sm:$0xff] %v1686
    %1743 = vst [vmem:[#allocation2 + $0x58] sm:$0xff] %v1687
    %1744 = vst [vmem:[#allocation2 + $0x60] sm:$0xff] %v1688
    %1745 = vst [vmem:[#allocation2 + $0x68] sm:$0xff] %v1689
    %1746 = vst [vmem:[#allocation2 + $0x70] sm:$0xff] %v1690
    %1747 = vst [vmem:[#allocation2 + $0x78] sm:$0xff] %v1691
    %1748 = vst [vmem:[#allocation2 + $0x80] sm:$0xff] %v1692
    %1749 = vst [vmem:[#allocation2 + $0x88] sm:$0xff] %v1693
    %1750 = vst [vmem:[#allocation2 + $0x90] sm:$0xff] %v1694
    %1751 = vst [vmem:[#allocation2 + $0x98] sm:$0xff] %v1695
    %1752 = vst [vmem:[#allocation2 + $0xa0] sm:$0xff] %v1696
    %1753 = vst [vmem:[#allocation2 + $0xa8] sm:$0xff] %v1697
    %1754 = vst [vmem:[#allocation2 + $0xb0] sm:$0xff] %v1698
    %1755 = vst [vmem:[#allocation2 + $0xb8] sm:$0xff] %v1699
    %1756 = vst [vmem:[#allocation2 + $0xc0] sm:$0xff] %v1700
    %1757 = vst [vmem:[#allocation2 + $0xc8] sm:$0xff] %v1701
    %1758 = vst [vmem:[#allocation2 + $0xd0] sm:$0xff] %v1702
    %1759 = vst [vmem:[#allocation2 + $0xd8] sm:$0xff] %v1703
    %1760 = vst [vmem:[#allocation2 + $0xe0] sm:$0xff] %v1704
    %1761 = vst [vmem:[#allocation2 + $0xe8] sm:$0xff] %v1705
    %1762 = vst [vmem:[#allocation2 + $0xf0] sm:$0xff] %v1706
    %1763 = vst [vmem:[#allocation2 + $0xf8] sm:$0xff] %v1707
    %1764 = vst [vmem:[#allocation2 + $0x100] sm:$0xff] %v1708
    %1765 = vst [vmem:[#allocation2 + $0x108] sm:$0xff] %v1709
    %1766 = vst [vmem:[#allocation2 + $0x110] sm:$0xff] %v1710
    %1767 = vst [vmem:[#allocation2 + $0x118] sm:$0xff] %v1711
    %1768 = vst [vmem:[#allocation2 + $0x120] sm:$0xff] %v1712
    %1769 = vst [vmem:[#allocation2 + $0x128] sm:$0xff] %v1713
    %1770 = vst [vmem:[#allocation2 + $0x130] sm:$0xff] %v1714
    %1771 = vst [vmem:[#allocation2 + $0x138] sm:$0xff] %v1715
    %1772 = vst [vmem:[#allocation2 + $0x140] sm:$0xff] %v1716
    %1773 = vst [vmem:[#allocation2 + $0x148] sm:$0xff] %v1717
    %1774 = vst [vmem:[#allocation2 + $0x150] sm:$0xff] %v1718
    %1775 = vst [vmem:[#allocation2 + $0x158] sm:$0xff] %v1719
    %1776 = vst [vmem:[#allocation2 + $0x160] sm:$0xff] %v1720
    %1777 = vst [vmem:[#allocation2 + $0x168] sm:$0xff] %v1721
    %1778 = vst [vmem:[#allocation2 + $0x170] sm:$0xff] %v1722
    %1779 = vst [vmem:[#allocation2 + $0x178] sm:$0xff] %v1723
    %1780 = vst [vmem:[#allocation2 + $0x180] sm:$0xff] %v1724
    %1781 = vst [vmem:[#allocation2 + $0x188] sm:$0xff] %v1725
    %1782 = vst [vmem:[#allocation2 + $0x190] sm:$0xff] %v1726
    %1783 = vst [vmem:[#allocation2 + $0x198] sm:$0xff] %v1727
    %1784 = vst [vmem:[#allocation2 + $0x1a0] sm:$0xff] %v1728
    %1785 = vst [vmem:[#allocation2 + $0x1a8] sm:$0xff] %v1729
    %1786 = vst [vmem:[#allocation2 + $0x1b0] sm:$0xff] %v1730
    %1787 = vst [vmem:[#allocation2 + $0x1b8] sm:$0xff] %v1731
    // Predicated region
    $region26: #{autoencoder_forward.1} parent=1 // pred_check
      _
    $region27: #{autoencoder_forward.1} parent=1 // pred_check_branch
      %1789 = sbr.rel (0) target = $region29
    $region28: #{autoencoder_forward.1} parent=1 // pred_region
      %s1791 = ssub.s32 7168, 7168
      %1792 = vsyncadd [#allocation3], %s1791
      %s1793 = sshll.u32 [#allocation2], 4
      %s1794 = int_to_ptr.vmem [resolvable:$true] %s1793
      %1799 = dma.vmem_to_hbm [thread:$0]  %s1794, 7168, %s6, [#allocation3], 896, 896, 56
    $region29: #{autoencoder_forward.1} parent=1 // pred_fallthru
      _
    // Predicated region
    $region30: #{autoencoder_forward.1} parent=1 // pred_check
      _
    $region31: #{autoencoder_forward.1} parent=1 // pred_check_branch
      %1801 = sbr.rel (0) target = $region33
    $region32: #{autoencoder_forward.1} parent=1 // pred_region
      %1802 = dma.done [#allocation3], 7168
    $region33: #{autoencoder_forward.1} parent=1 // pred_fallthru
      _
    %1803 = vsyncpa [#allocation3], 1

</llo_original>
